<compile_context>
chip_gen: v6e
topology: v6e:2x2x1
jax: 0.10.0
libtpu: 0.0.40
codegen_flags: <defaults>
</compile_context>

<pallas_src>
import functools

import jax
import jax.numpy as jnp
from jax.experimental import pallas as pl
from jax.experimental.pallas import tpu as pltpu


# -----------------------------------------------------------------------------
# Fused Pallas kernel: conv1 -> conv2+pool -> conv3+pool -> fc for one batch elem
# -----------------------------------------------------------------------------
def _conv_stack_kernel(x_ref, w1_ref, b1_ref, w2e_ref, w2o_ref, b2_ref,
                       w3e_ref, w3o_ref, b3_ref, wfc_ref, bfc_ref,
                       o_ref, h1, h2, h3, *, T):
    """VMEM tiles for one batch element.

    x_ref   : (1, T, M)             input spectrogram (Cin = 1)
    w1_ref  : (3, M, C*M)           banded conv1 weights, one matrix per time tap
    w2*_ref : (3, C*M, C*M/2)       banded conv2 weights, even/odd mel cols (pool folded)
    w3*_ref : (3, C*M/2, 2C*M/4)    banded conv3 weights, even/odd mel cols (pool folded)
    b*_ref  : (1, lanes)            per-lane folded BN bias rows
    wfc/bfc : (2C*M/4, F), (1, F)   fully-connected head
    o_ref   : (1, T, F)
    h1/h2/h3: VMEM scratch (T+2, lanes) -- layer inputs with a zero time halo
    """
    f32 = jnp.float32

    def conv_taps(src, w_ref):
        # sum over the three time taps; each tap is one lane-dense MXU matmul
        acc = jnp.dot(src[pl.ds(0, T), :], w_ref[0], preferred_element_type=f32)
        acc = acc + jnp.dot(src[pl.ds(1, T), :], w_ref[1], preferred_element_type=f32)
        acc = acc + jnp.dot(src[pl.ds(2, T), :], w_ref[2], preferred_element_type=f32)
        return acc

    # ---- stage input with a 1-row time halo (rows 0 and T+1 stay zero) -------
    h1[...] = jnp.zeros_like(h1)
    h1[pl.ds(1, T), :] = x_ref[0]

    # ---- layer 1: conv(1->C) + folded BN + ReLU -------------------------------
    a1 = jnp.maximum(conv_taps(h1, w1_ref) + b1_ref[...], 0.0)
    h2[...] = jnp.zeros_like(h2)
    h2[pl.ds(1, T), :] = a1

    # ---- layer 2: conv(C->C) + BN + ReLU + MaxPool(1,2) (parity-folded) -------
    z2 = jnp.maximum(conv_taps(h2, w2e_ref), conv_taps(h2, w2o_ref))
    a2 = jnp.maximum(z2 + b2_ref[...], 0.0)          # Dropout(0.25) -> identity
    h3[...] = jnp.zeros_like(h3)
    h3[pl.ds(1, T), :] = a2

    # ---- layer 3: conv(C->2C) + BN + ReLU + MaxPool(1,2) (parity-folded) ------
    z3 = jnp.maximum(conv_taps(h3, w3e_ref), conv_taps(h3, w3o_ref))
    a3 = jnp.maximum(z3 + b3_ref[...], 0.0)          # channel-major == flatten order

    # ---- fully-connected head (transpose+flatten implicit in the layout) ------
    o_ref[0] = (jnp.dot(a3, wfc_ref[...], preferred_element_type=f32)
                + bfc_ref[...])                      # Dropout(0.5) -> identity


# -----------------------------------------------------------------------------
# Weight preprocessing (trace-time JAX, one-off): BN fold + banded matrices
# -----------------------------------------------------------------------------
def fold_bn(w_hwio, conv_b, gamma, beta, eps=1e-5):
    # eval-mode BatchNorm2d with running_mean=0, running_var=1 (PyTorch init)
    scale = gamma / jnp.sqrt(1.0 + eps)
    return w_hwio * scale, conv_b * scale + beta


def _banded_time_taps(w_hwio, M):
    """Fold the mel-direction taps of a 3x3 'same' conv into banded matrices.

    Returns (3, Cin*M, Cout*M) with channel-major (c*M + m) row/col layout so
    out_row(t) = sum_dt in_row(t+dt-1) @ Wb[dt]   (zero padding in mel is implicit).
    """
    _, _, Cin, Cout = w_hwio.shape
    mats = []
    for dt in range(3):
        acc = jnp.zeros((Cin, M, Cout, M), jnp.float32)
        for dm in range(3):
            # sel[m_in, m_out] = 1 iff m_in == m_out + (dm - 1)
            sel = jnp.eye(M, M, k=1 - dm, dtype=jnp.float32)
            acc = acc + jnp.einsum("io,mn->imon", w_hwio[dt, dm], sel)
        mats.append(acc.reshape(Cin * M, Cout * M))
    return jnp.stack(mats)


def _fold_maxpool_w2(wb, Cout, M):
    """Split banded matrices into even/odd mel output columns (MaxPool(1,2) fold)."""
    w4 = wb.reshape(3, wb.shape[1], Cout, M)
    we = w4[..., 0::2].reshape(3, wb.shape[1], Cout * (M // 2))
    wo = w4[..., 1::2].reshape(3, wb.shape[1], Cout * (M // 2))
    return we, wo


# -----------------------------------------------------------------------------
# Forward pass: one fused pallas_call over the batch grid
# -----------------------------------------------------------------------------
def conv_stack_forward(params, x_nchw):
    B, Cin0, T, M = x_nchw.shape
    assert Cin0 == 1 and M % 4 == 0
    C1 = params["conv1_w"].shape[-1]
    C2 = params["conv3_w"].shape[-1]
    M2, M4 = M // 2, M // 4
    F = params["fc_w"].shape[-1]

    x = x_nchw[:, 0]                                          # (B, T, M)

    w1h, b1 = fold_bn(params["conv1_w"], params["conv1_b"],
                      params["bn1_g"], params["bn1_b"])
    w2h, b2 = fold_bn(params["conv2_w"], params["conv2_b"],
                      params["bn2_g"], params["bn2_b"])
    w3h, b3 = fold_bn(params["conv3_w"], params["conv3_b"],
                      params["bn3_g"], params["bn3_b"])

    w1 = _banded_time_taps(w1h, M)                                    # (3, M,     C1*M )
    w2e, w2o = _fold_maxpool_w2(_banded_time_taps(w2h, M), C1, M)     # (3, C1*M,  C1*M2)
    w3e, w3o = _fold_maxpool_w2(_banded_time_taps(w3h, M2), C2, M2)   # (3, C1*M2, C2*M4)

    b1r = jnp.repeat(b1, M).reshape(1, C1 * M)
    b2r = jnp.repeat(b2, M2).reshape(1, C1 * M2)
    b3r = jnp.repeat(b3, M4).reshape(1, C2 * M4)
    wfc = params["fc_w"]
    bfc = params["fc_b"].reshape(1, F)

    kern = functools.partial(_conv_stack_kernel, T=T)
    rep3 = lambda b: (0, 0, 0)
    rep2 = lambda b: (0, 0)

    return pl.pallas_call(
        kern,
        out_shape=jax.ShapeDtypeStruct((B, T, F), jnp.float32),
        grid=(B,),
        in_specs=[
            pl.BlockSpec((1, T, M), lambda b: (b, 0, 0)),
            pl.BlockSpec(w1.shape, rep3),
            pl.BlockSpec(b1r.shape, rep2),
            pl.BlockSpec(w2e.shape, rep3),
            pl.BlockSpec(w2o.shape, rep3),
            pl.BlockSpec(b2r.shape, rep2),
            pl.BlockSpec(w3e.shape, rep3),
            pl.BlockSpec(w3o.shape, rep3),
            pl.BlockSpec(b3r.shape, rep2),
            pl.BlockSpec(wfc.shape, rep2),
            pl.BlockSpec(bfc.shape, rep2),
        ],
        out_specs=pl.BlockSpec((1, T, F), lambda b: (b, 0, 0)),
        scratch_shapes=[
            pltpu.VMEM((T + 2, M), jnp.float32),
            pltpu.VMEM((T + 2, C1 * M), jnp.float32),
            pltpu.VMEM((T + 2, C1 * M2), jnp.float32),
        ],
        compiler_params=pltpu.CompilerParams(
            dimension_semantics=("parallel",)),
    )(x, w1, b1r, w2e, w2o, b2r, w3e, w3o, b3r, wfc, bfc)


# -----------------------------------------------------------------------------
# Deterministic parameter init (synthetic)
# -----------------------------------------------------------------------------
def init_params(key, n_mels, cnn_unit, fc_unit):
    ks = jax.random.split(key, 14)
    c2 = cnn_unit * 2
    fc_in = c2 * (n_mels // 4)

    def cw(k, cin, cout):
        return jax.random.normal(k, (3, 3, cin, cout), jnp.float32) / jnp.sqrt(9.0 * cin)

    def vec(k, n, scale=0.1):
        return scale * jax.random.normal(k, (n,), jnp.float32)

    return {
        "conv1_w": cw(ks[0], 1, cnn_unit),        "conv1_b": vec(ks[1], cnn_unit),
        "bn1_g": 1.0 + vec(ks[2], cnn_unit),      "bn1_b": vec(ks[3], cnn_unit),
        "conv2_w": cw(ks[4], cnn_unit, cnn_unit), "conv2_b": vec(ks[5], cnn_unit),
        "bn2_g": 1.0 + vec(ks[6], cnn_unit),      "bn2_b": vec(ks[7], cnn_unit),
        "conv3_w": cw(ks[8], cnn_unit, c2),       "conv3_b": vec(ks[9], c2),
        "bn3_g": 1.0 + vec(ks[10], c2),           "bn3_b": vec(ks[11], c2),
        "fc_w": jax.random.normal(ks[12], (fc_in, fc_unit), jnp.float32) / jnp.sqrt(fc_in),
        "fc_b": vec(ks[13], fc_unit),
    }


# -----------------------------------------------------------------------------
# Pure-JAX reference (same eval-mode math) used as a correctness cross-check
# -----------------------------------------------------------------------------
def maxpool_w2(x_nhwc):
    B, H, W, C = x_nhwc.shape
    return jnp.max(x_nhwc.reshape(B, H, W // 2, 2, C), axis=3)


def reference_forward(params, x_nchw):
    x = jnp.transpose(x_nchw, (0, 2, 3, 1))

    def block(x, wk, bk, gk, bek):
        w, b = fold_bn(params[wk], params[bk], params[gk], params[bek])
        y = jax.lax.conv_general_dilated(
            x, w, (1, 1), "SAME", dimension_numbers=("NHWC", "HWIO", "NHWC"))
        return jnp.maximum(y + b, 0.0)

    x = block(x, "conv1_w", "conv1_b", "bn1_g", "bn1_b")
    x = block(x, "conv2_w", "conv2_b", "bn2_g", "bn2_b")
    x = maxpool_w2(x)
    x = block(x, "conv3_w", "conv3_b", "bn3_g", "bn3_b")
    x = maxpool_w2(x)
    B, T, Mq, C2 = x.shape
    x = jnp.transpose(x, (0, 1, 3, 2)).reshape(B, T, C2 * Mq)
    return x @ params["fc_w"] + params["fc_b"]


if __name__ == "__main__":
    n_mels, cnn_unit, fc_unit = 16, 4, 32
    B, T = 2, 8

    key = jax.random.PRNGKey(0)
    kx, kp = jax.random.split(key)
    # PyTorch NCHW input: (batch, channel=1, time, n_mels)
    x = jax.random.normal(kx, (B, 1, T, n_mels), jnp.float32)
    params = init_params(kp, n_mels, cnn_unit, fc_unit)

    fwd = jax.jit(conv_stack_forward)
    out = jax.block_until_ready(fwd(params, x))

    assert out.shape == (B, T, fc_unit), out.shape
    ref = reference_forward(params, x)
    if not jnp.allclose(out, ref, atol=2e-2, rtol=2e-2):
        raise AssertionError(
            f"mismatch vs reference: max abs err = {jnp.max(jnp.abs(out - ref))}")

    print("KERNEL_OK")
</pallas_src>

<mosaic_0001>
module attributes {stable_mosaic.version = 11 : i64} {
  func.func @_conv_stack_kernel(%arg0: i32, %arg1: memref<1x8x16xf32, #tpu.memory_space<vmem>>, %arg2: memref<3x16x64xf32, #tpu.memory_space<vmem>>, %arg3: memref<1x64xf32, #tpu.memory_space<vmem>>, %arg4: memref<3x64x32xf32, #tpu.memory_space<vmem>>, %arg5: memref<3x64x32xf32, #tpu.memory_space<vmem>>, %arg6: memref<1x32xf32, #tpu.memory_space<vmem>>, %arg7: memref<3x32x32xf32, #tpu.memory_space<vmem>>, %arg8: memref<3x32x32xf32, #tpu.memory_space<vmem>>, %arg9: memref<1x32xf32, #tpu.memory_space<vmem>>, %arg10: memref<32x32xf32, #tpu.memory_space<vmem>>, %arg11: memref<1x32xf32, #tpu.memory_space<vmem>>, %arg12: memref<1x8x32xf32, #tpu.memory_space<vmem>>, %arg13: memref<10x16xf32, #tpu.memory_space<vmem>>, %arg14: memref<10x64xf32, #tpu.memory_space<vmem>>, %arg15: memref<10x32xf32, #tpu.memory_space<vmem>>) attributes {dimension_semantics = [#tpu.dimension_semantics<parallel>], iteration_bounds = array<i64: 2>, scalar_prefetch = 0 : i64, scratch_operands = 3 : i64, tpu.core_type = #tpu.core_type<tc>, window_params = [{transform_indices = @transform_0, window_bounds = array<i64: 1, 8, 16>}, {pipeline_mode = #tpu.pipeline_mode<synchronous>, transform_indices = @transform_1, window_bounds = array<i64: 3, 16, 64>}, {pipeline_mode = #tpu.pipeline_mode<synchronous>, transform_indices = @transform_2, window_bounds = array<i64: 1, 64>}, {pipeline_mode = #tpu.pipeline_mode<synchronous>, transform_indices = @transform_3, window_bounds = array<i64: 3, 64, 32>}, {pipeline_mode = #tpu.pipeline_mode<synchronous>, transform_indices = @transform_4, window_bounds = array<i64: 3, 64, 32>}, {pipeline_mode = #tpu.pipeline_mode<synchronous>, transform_indices = @transform_5, window_bounds = array<i64: 1, 32>}, {pipeline_mode = #tpu.pipeline_mode<synchronous>, transform_indices = @transform_6, window_bounds = array<i64: 3, 32, 32>}, {pipeline_mode = #tpu.pipeline_mode<synchronous>, transform_indices = @transform_7, window_bounds = array<i64: 3, 32, 32>}, {pipeline_mode = #tpu.pipeline_mode<synchronous>, transform_indices = @transform_8, window_bounds = array<i64: 1, 32>}, {pipeline_mode = #tpu.pipeline_mode<synchronous>, transform_indices = @transform_9, window_bounds = array<i64: 32, 32>}, {pipeline_mode = #tpu.pipeline_mode<synchronous>, transform_indices = @transform_10, window_bounds = array<i64: 1, 32>}, {transform_indices = @transform_11, window_bounds = array<i64: 1, 8, 32>}]} {
    %cst = arith.constant 0.000000e+00 : f32
    %0 = vector.broadcast %cst : f32 to vector<10x16xf32>
    %c0 = arith.constant 0 : index
    %c0_0 = arith.constant 0 : index
    %1 = vector.load %arg13[%c0, %c0_0] : memref<10x16xf32, #tpu.memory_space<vmem>>, vector<10x16xf32>
    tpu.vector_store %arg13[%c0, %c0_0], %0 {strides = array<i32>} : memref<10x16xf32, #tpu.memory_space<vmem>>, vector<10x16xf32>,
    %c0_1 = arith.constant 0 : index
    %c0_2 = arith.constant 0 : index
    %c0_3 = arith.constant 0 : index
    %2 = vector.load %arg1[%c0_1, %c0_2, %c0_3] : memref<1x8x16xf32, #tpu.memory_space<vmem>>, vector<1x8x16xf32>
    %3 = vector.shape_cast %2 : vector<1x8x16xf32> to vector<8x16xf32>
    %c1 = arith.constant 1 : index
    %c0_4 = arith.constant 0 : index
    %4 = vector.load %arg13[%c1, %c0_4] : memref<10x16xf32, #tpu.memory_space<vmem>>, vector<8x16xf32>
    tpu.vector_store %arg13[%c1, %c0_4], %3 {strides = array<i32>} : memref<10x16xf32, #tpu.memory_space<vmem>>, vector<8x16xf32>,
    %c0_5 = arith.constant 0 : index
    %c0_6 = arith.constant 0 : index
    %5 = vector.load %arg13[%c0_5, %c0_6] : memref<10x16xf32, #tpu.memory_space<vmem>>, vector<8x16xf32>
    %c0_7 = arith.constant 0 : index
    %c0_8 = arith.constant 0 : index
    %c0_9 = arith.constant 0 : index
    %6 = vector.load %arg2[%c0_7, %c0_8, %c0_9] : memref<3x16x64xf32, #tpu.memory_space<vmem>>, vector<1x16x64xf32>
    %7 = vector.shape_cast %6 : vector<1x16x64xf32> to vector<16x64xf32>
    %cst_10 = arith.constant dense<0.000000e+00> : vector<8x64xf32>
    %8 = tpu.matmul %5, %7, %cst_10 {dimension_numbers = #tpu.dot_dimension_numbers<[1], [0], [0], [1], [0, 0, 1, 1], [], []>} : vector<8x16xf32>, vector<16x64xf32>, vector<8x64xf32> -> vector<8x64xf32>
    %c1_11 = arith.constant 1 : index
    %c0_12 = arith.constant 0 : index
    %9 = vector.load %arg13[%c1_11, %c0_12] : memref<10x16xf32, #tpu.memory_space<vmem>>, vector<8x16xf32>
    %c1_13 = arith.constant 1 : index
    %c0_14 = arith.constant 0 : index
    %c0_15 = arith.constant 0 : index
    %10 = vector.load %arg2[%c1_13, %c0_14, %c0_15] : memref<3x16x64xf32, #tpu.memory_space<vmem>>, vector<1x16x64xf32>
    %11 = vector.shape_cast %10 : vector<1x16x64xf32> to vector<16x64xf32>
    %cst_16 = arith.constant dense<0.000000e+00> : vector<8x64xf32>
    %12 = tpu.matmul %9, %11, %cst_16 {dimension_numbers = #tpu.dot_dimension_numbers<[1], [0], [0], [1], [0, 0, 1, 1], [], []>} : vector<8x16xf32>, vector<16x64xf32>, vector<8x64xf32> -> vector<8x64xf32>
    %13 = arith.addf %8, %12 : vector<8x64xf32>
    %c2 = arith.constant 2 : index
    %c0_17 = arith.constant 0 : index
    %14 = vector.load %arg13[%c2, %c0_17] : memref<10x16xf32, #tpu.memory_space<vmem>>, vector<8x16xf32>
    %c2_18 = arith.constant 2 : index
    %c0_19 = arith.constant 0 : index
    %c0_20 = arith.constant 0 : index
    %15 = vector.load %arg2[%c2_18, %c0_19, %c0_20] : memref<3x16x64xf32, #tpu.memory_space<vmem>>, vector<1x16x64xf32>
    %16 = vector.shape_cast %15 : vector<1x16x64xf32> to vector<16x64xf32>
    %cst_21 = arith.constant dense<0.000000e+00> : vector<8x64xf32>
    %17 = tpu.matmul %14, %16, %cst_21 {dimension_numbers = #tpu.dot_dimension_numbers<[1], [0], [0], [1], [0, 0, 1, 1], [], []>} : vector<8x16xf32>, vector<16x64xf32>, vector<8x64xf32> -> vector<8x64xf32>
    %18 = arith.addf %13, %17 : vector<8x64xf32>
    %c0_22 = arith.constant 0 : index
    %c0_23 = arith.constant 0 : index
    %19 = vector.load %arg3[%c0_22, %c0_23] : memref<1x64xf32, #tpu.memory_space<vmem>>, vector<1x64xf32>
    %20 = vector.broadcast %19 : vector<1x64xf32> to vector<8x64xf32>
    %21 = arith.addf %18, %20 : vector<8x64xf32>
    %cst_24 = arith.constant 0.000000e+00 : f32
    %22 = vector.broadcast %cst_24 : f32 to vector<8x64xf32>
    %23 = arith.maximumf %21, %22 : vector<8x64xf32>
    %cst_25 = arith.constant 0.000000e+00 : f32
    %24 = vector.broadcast %cst_25 : f32 to vector<10x64xf32>
    %c0_26 = arith.constant 0 : index
    %c0_27 = arith.constant 0 : index
    %25 = vector.load %arg14[%c0_26, %c0_27] : memref<10x64xf32, #tpu.memory_space<vmem>>, vector<10x64xf32>
    tpu.vector_store %arg14[%c0_26, %c0_27], %24 {strides = array<i32>} : memref<10x64xf32, #tpu.memory_space<vmem>>, vector<10x64xf32>,
    %c1_28 = arith.constant 1 : index
    %c0_29 = arith.constant 0 : index
    %26 = vector.load %arg14[%c1_28, %c0_29] : memref<10x64xf32, #tpu.memory_space<vmem>>, vector<8x64xf32>
    tpu.vector_store %arg14[%c1_28, %c0_29], %23 {strides = array<i32>} : memref<10x64xf32, #tpu.memory_space<vmem>>, vector<8x64xf32>,
    %c0_30 = arith.constant 0 : index
    %c0_31 = arith.constant 0 : index
    %27 = vector.load %arg14[%c0_30, %c0_31] : memref<10x64xf32, #tpu.memory_space<vmem>>, vector<8x64xf32>
    %c0_32 = arith.constant 0 : index
    %c0_33 = arith.constant 0 : index
    %c0_34 = arith.constant 0 : index
    %28 = vector.load %arg4[%c0_32, %c0_33, %c0_34] : memref<3x64x32xf32, #tpu.memory_space<vmem>>, vector<1x64x32xf32>
    %29 = vector.shape_cast %28 : vector<1x64x32xf32> to vector<64x32xf32>
    %cst_35 = arith.constant dense<0.000000e+00> : vector<8x32xf32>
    %30 = tpu.matmul %27, %29, %cst_35 {dimension_numbers = #tpu.dot_dimension_numbers<[1], [0], [0], [1], [0, 0, 1, 1], [], []>} : vector<8x64xf32>, vector<64x32xf32>, vector<8x32xf32> -> vector<8x32xf32>
    %c1_36 = arith.constant 1 : index
    %c0_37 = arith.constant 0 : index
    %31 = vector.load %arg14[%c1_36, %c0_37] : memref<10x64xf32, #tpu.memory_space<vmem>>, vector<8x64xf32>
    %c1_38 = arith.constant 1 : index
    %c0_39 = arith.constant 0 : index
    %c0_40 = arith.constant 0 : index
    %32 = vector.load %arg4[%c1_38, %c0_39, %c0_40] : memref<3x64x32xf32, #tpu.memory_space<vmem>>, vector<1x64x32xf32>
    %33 = vector.shape_cast %32 : vector<1x64x32xf32> to vector<64x32xf32>
    %cst_41 = arith.constant dense<0.000000e+00> : vector<8x32xf32>
    %34 = tpu.matmul %31, %33, %cst_41 {dimension_numbers = #tpu.dot_dimension_numbers<[1], [0], [0], [1], [0, 0, 1, 1], [], []>} : vector<8x64xf32>, vector<64x32xf32>, vector<8x32xf32> -> vector<8x32xf32>
    %35 = arith.addf %30, %34 : vector<8x32xf32>
    %c2_42 = arith.constant 2 : index
    %c0_43 = arith.constant 0 : index
    %36 = vector.load %arg14[%c2_42, %c0_43] : memref<10x64xf32, #tpu.memory_space<vmem>>, vector<8x64xf32>
    %c2_44 = arith.constant 2 : index
    %c0_45 = arith.constant 0 : index
    %c0_46 = arith.constant 0 : index
    %37 = vector.load %arg4[%c2_44, %c0_45, %c0_46] : memref<3x64x32xf32, #tpu.memory_space<vmem>>, vector<1x64x32xf32>
    %38 = vector.shape_cast %37 : vector<1x64x32xf32> to vector<64x32xf32>
    %cst_47 = arith.constant dense<0.000000e+00> : vector<8x32xf32>
    %39 = tpu.matmul %36, %38, %cst_47 {dimension_numbers = #tpu.dot_dimension_numbers<[1], [0], [0], [1], [0, 0, 1, 1], [], []>} : vector<8x64xf32>, vector<64x32xf32>, vector<8x32xf32> -> vector<8x32xf32>
    %40 = arith.addf %35, %39 : vector<8x32xf32>
    %c0_48 = arith.constant 0 : index
    %c0_49 = arith.constant 0 : index
    %41 = vector.load %arg14[%c0_48, %c0_49] : memref<10x64xf32, #tpu.memory_space<vmem>>, vector<8x64xf32>
    %c0_50 = arith.constant 0 : index
    %c0_51 = arith.constant 0 : index
    %c0_52 = arith.constant 0 : index
    %42 = vector.load %arg5[%c0_50, %c0_51, %c0_52] : memref<3x64x32xf32, #tpu.memory_space<vmem>>, vector<1x64x32xf32>
    %43 = vector.shape_cast %42 : vector<1x64x32xf32> to vector<64x32xf32>
    %cst_53 = arith.constant dense<0.000000e+00> : vector<8x32xf32>
    %44 = tpu.matmul %41, %43, %cst_53 {dimension_numbers = #tpu.dot_dimension_numbers<[1], [0], [0], [1], [0, 0, 1, 1], [], []>} : vector<8x64xf32>, vector<64x32xf32>, vector<8x32xf32> -> vector<8x32xf32>
    %c1_54 = arith.constant 1 : index
    %c0_55 = arith.constant 0 : index
    %45 = vector.load %arg14[%c1_54, %c0_55] : memref<10x64xf32, #tpu.memory_space<vmem>>, vector<8x64xf32>
    %c1_56 = arith.constant 1 : index
    %c0_57 = arith.constant 0 : index
    %c0_58 = arith.constant 0 : index
    %46 = vector.load %arg5[%c1_56, %c0_57, %c0_58] : memref<3x64x32xf32, #tpu.memory_space<vmem>>, vector<1x64x32xf32>
    %47 = vector.shape_cast %46 : vector<1x64x32xf32> to vector<64x32xf32>
    %cst_59 = arith.constant dense<0.000000e+00> : vector<8x32xf32>
    %48 = tpu.matmul %45, %47, %cst_59 {dimension_numbers = #tpu.dot_dimension_numbers<[1], [0], [0], [1], [0, 0, 1, 1], [], []>} : vector<8x64xf32>, vector<64x32xf32>, vector<8x32xf32> -> vector<8x32xf32>
    %49 = arith.addf %44, %48 : vector<8x32xf32>
    %c2_60 = arith.constant 2 : index
    %c0_61 = arith.constant 0 : index
    %50 = vector.load %arg14[%c2_60, %c0_61] : memref<10x64xf32, #tpu.memory_space<vmem>>, vector<8x64xf32>
    %c2_62 = arith.constant 2 : index
    %c0_63 = arith.constant 0 : index
    %c0_64 = arith.constant 0 : index
    %51 = vector.load %arg5[%c2_62, %c0_63, %c0_64] : memref<3x64x32xf32, #tpu.memory_space<vmem>>, vector<1x64x32xf32>
    %52 = vector.shape_cast %51 : vector<1x64x32xf32> to vector<64x32xf32>
    %cst_65 = arith.constant dense<0.000000e+00> : vector<8x32xf32>
    %53 = tpu.matmul %50, %52, %cst_65 {dimension_numbers = #tpu.dot_dimension_numbers<[1], [0], [0], [1], [0, 0, 1, 1], [], []>} : vector<8x64xf32>, vector<64x32xf32>, vector<8x32xf32> -> vector<8x32xf32>
    %54 = arith.addf %49, %53 : vector<8x32xf32>
    %55 = arith.maximumf %40, %54 : vector<8x32xf32>
    %c0_66 = arith.constant 0 : index
    %c0_67 = arith.constant 0 : index
    %56 = vector.load %arg6[%c0_66, %c0_67] : memref<1x32xf32, #tpu.memory_space<vmem>>, vector<1x32xf32>
    %57 = vector.broadcast %56 : vector<1x32xf32> to vector<8x32xf32>
    %58 = arith.addf %55, %57 : vector<8x32xf32>
    %cst_68 = arith.constant 0.000000e+00 : f32
    %59 = vector.broadcast %cst_68 : f32 to vector<8x32xf32>
    %60 = arith.maximumf %58, %59 : vector<8x32xf32>
    %cst_69 = arith.constant 0.000000e+00 : f32
    %61 = vector.broadcast %cst_69 : f32 to vector<10x32xf32>
    %c0_70 = arith.constant 0 : index
    %c0_71 = arith.constant 0 : index
    %62 = vector.load %arg15[%c0_70, %c0_71] : memref<10x32xf32, #tpu.memory_space<vmem>>, vector<10x32xf32>
    tpu.vector_store %arg15[%c0_70, %c0_71], %61 {strides = array<i32>} : memref<10x32xf32, #tpu.memory_space<vmem>>, vector<10x32xf32>,
    %c1_72 = arith.constant 1 : index
    %c0_73 = arith.constant 0 : index
    %63 = vector.load %arg15[%c1_72, %c0_73] : memref<10x32xf32, #tpu.memory_space<vmem>>, vector<8x32xf32>
    tpu.vector_store %arg15[%c1_72, %c0_73], %60 {strides = array<i32>} : memref<10x32xf32, #tpu.memory_space<vmem>>, vector<8x32xf32>,
    %c0_74 = arith.constant 0 : index
    %c0_75 = arith.constant 0 : index
    %64 = vector.load %arg15[%c0_74, %c0_75] : memref<10x32xf32, #tpu.memory_space<vmem>>, vector<8x32xf32>
    %c0_76 = arith.constant 0 : index
    %c0_77 = arith.constant 0 : index
    %c0_78 = arith.constant 0 : index
    %65 = vector.load %arg7[%c0_76, %c0_77, %c0_78] : memref<3x32x32xf32, #tpu.memory_space<vmem>>, vector<1x32x32xf32>
    %66 = vector.shape_cast %65 : vector<1x32x32xf32> to vector<32x32xf32>
    %cst_79 = arith.constant dense<0.000000e+00> : vector<8x32xf32>
    %67 = tpu.matmul %64, %66, %cst_79 {dimension_numbers = #tpu.dot_dimension_numbers<[1], [0], [0], [1], [0, 0, 1, 1], [], []>} : vector<8x32xf32>, vector<32x32xf32>, vector<8x32xf32> -> vector<8x32xf32>
    %c1_80 = arith.constant 1 : index
    %c0_81 = arith.constant 0 : index
    %68 = vector.load %arg15[%c1_80, %c0_81] : memref<10x32xf32, #tpu.memory_space<vmem>>, vector<8x32xf32>
    %c1_82 = arith.constant 1 : index
    %c0_83 = arith.constant 0 : index
    %c0_84 = arith.constant 0 : index
    %69 = vector.load %arg7[%c1_82, %c0_83, %c0_84] : memref<3x32x32xf32, #tpu.memory_space<vmem>>, vector<1x32x32xf32>
    %70 = vector.shape_cast %69 : vector<1x32x32xf32> to vector<32x32xf32>
    %cst_85 = arith.constant dense<0.000000e+00> : vector<8x32xf32>
    %71 = tpu.matmul %68, %70, %cst_85 {dimension_numbers = #tpu.dot_dimension_numbers<[1], [0], [0], [1], [0, 0, 1, 1], [], []>} : vector<8x32xf32>, vector<32x32xf32>, vector<8x32xf32> -> vector<8x32xf32>
    %72 = arith.addf %67, %71 : vector<8x32xf32>
    %c2_86 = arith.constant 2 : index
    %c0_87 = arith.constant 0 : index
    %73 = vector.load %arg15[%c2_86, %c0_87] : memref<10x32xf32, #tpu.memory_space<vmem>>, vector<8x32xf32>
    %c2_88 = arith.constant 2 : index
    %c0_89 = arith.constant 0 : index
    %c0_90 = arith.constant 0 : index
    %74 = vector.load %arg7[%c2_88, %c0_89, %c0_90] : memref<3x32x32xf32, #tpu.memory_space<vmem>>, vector<1x32x32xf32>
    %75 = vector.shape_cast %74 : vector<1x32x32xf32> to vector<32x32xf32>
    %cst_91 = arith.constant dense<0.000000e+00> : vector<8x32xf32>
    %76 = tpu.matmul %73, %75, %cst_91 {dimension_numbers = #tpu.dot_dimension_numbers<[1], [0], [0], [1], [0, 0, 1, 1], [], []>} : vector<8x32xf32>, vector<32x32xf32>, vector<8x32xf32> -> vector<8x32xf32>
    %77 = arith.addf %72, %76 : vector<8x32xf32>
    %c0_92 = arith.constant 0 : index
    %c0_93 = arith.constant 0 : index
    %78 = vector.load %arg15[%c0_92, %c0_93] : memref<10x32xf32, #tpu.memory_space<vmem>>, vector<8x32xf32>
    %c0_94 = arith.constant 0 : index
    %c0_95 = arith.constant 0 : index
    %c0_96 = arith.constant 0 : index
    %79 = vector.load %arg8[%c0_94, %c0_95, %c0_96] : memref<3x32x32xf32, #tpu.memory_space<vmem>>, vector<1x32x32xf32>
    %80 = vector.shape_cast %79 : vector<1x32x32xf32> to vector<32x32xf32>
    %cst_97 = arith.constant dense<0.000000e+00> : vector<8x32xf32>
    %81 = tpu.matmul %78, %80, %cst_97 {dimension_numbers = #tpu.dot_dimension_numbers<[1], [0], [0], [1], [0, 0, 1, 1], [], []>} : vector<8x32xf32>, vector<32x32xf32>, vector<8x32xf32> -> vector<8x32xf32>
    %c1_98 = arith.constant 1 : index
    %c0_99 = arith.constant 0 : index
    %82 = vector.load %arg15[%c1_98, %c0_99] : memref<10x32xf32, #tpu.memory_space<vmem>>, vector<8x32xf32>
    %c1_100 = arith.constant 1 : index
    %c0_101 = arith.constant 0 : index
    %c0_102 = arith.constant 0 : index
    %83 = vector.load %arg8[%c1_100, %c0_101, %c0_102] : memref<3x32x32xf32, #tpu.memory_space<vmem>>, vector<1x32x32xf32>
    %84 = vector.shape_cast %83 : vector<1x32x32xf32> to vector<32x32xf32>
    %cst_103 = arith.constant dense<0.000000e+00> : vector<8x32xf32>
    %85 = tpu.matmul %82, %84, %cst_103 {dimension_numbers = #tpu.dot_dimension_numbers<[1], [0], [0], [1], [0, 0, 1, 1], [], []>} : vector<8x32xf32>, vector<32x32xf32>, vector<8x32xf32> -> vector<8x32xf32>
    %86 = arith.addf %81, %85 : vector<8x32xf32>
    %c2_104 = arith.constant 2 : index
    %c0_105 = arith.constant 0 : index
    %87 = vector.load %arg15[%c2_104, %c0_105] : memref<10x32xf32, #tpu.memory_space<vmem>>, vector<8x32xf32>
    %c2_106 = arith.constant 2 : index
    %c0_107 = arith.constant 0 : index
    %c0_108 = arith.constant 0 : index
    %88 = vector.load %arg8[%c2_106, %c0_107, %c0_108] : memref<3x32x32xf32, #tpu.memory_space<vmem>>, vector<1x32x32xf32>
    %89 = vector.shape_cast %88 : vector<1x32x32xf32> to vector<32x32xf32>
    %cst_109 = arith.constant dense<0.000000e+00> : vector<8x32xf32>
    %90 = tpu.matmul %87, %89, %cst_109 {dimension_numbers = #tpu.dot_dimension_numbers<[1], [0], [0], [1], [0, 0, 1, 1], [], []>} : vector<8x32xf32>, vector<32x32xf32>, vector<8x32xf32> -> vector<8x32xf32>
    %91 = arith.addf %86, %90 : vector<8x32xf32>
    %92 = arith.maximumf %77, %91 : vector<8x32xf32>
    %c0_110 = arith.constant 0 : index
    %c0_111 = arith.constant 0 : index
    %93 = vector.load %arg9[%c0_110, %c0_111] : memref<1x32xf32, #tpu.memory_space<vmem>>, vector<1x32xf32>
    %94 = vector.broadcast %93 : vector<1x32xf32> to vector<8x32xf32>
    %95 = arith.addf %92, %94 : vector<8x32xf32>
    %cst_112 = arith.constant 0.000000e+00 : f32
    %96 = vector.broadcast %cst_112 : f32 to vector<8x32xf32>
    %97 = arith.maximumf %95, %96 : vector<8x32xf32>
    %c0_113 = arith.constant 0 : index
    %c0_114 = arith.constant 0 : index
    %98 = vector.load %arg10[%c0_113, %c0_114] : memref<32x32xf32, #tpu.memory_space<vmem>>, vector<32x32xf32>
    %cst_115 = arith.constant dense<0.000000e+00> : vector<8x32xf32>
    %99 = tpu.matmul %97, %98, %cst_115 {dimension_numbers = #tpu.dot_dimension_numbers<[1], [0], [0], [1], [0, 0, 1, 1], [], []>} : vector<8x32xf32>, vector<32x32xf32>, vector<8x32xf32> -> vector<8x32xf32>
    %c0_116 = arith.constant 0 : index
    %c0_117 = arith.constant 0 : index
    %100 = vector.load %arg11[%c0_116, %c0_117] : memref<1x32xf32, #tpu.memory_space<vmem>>, vector<1x32xf32>
    %101 = vector.broadcast %100 : vector<1x32xf32> to vector<8x32xf32>
    %102 = arith.addf %99, %101 : vector<8x32xf32>
    %c0_118 = arith.constant 0 : index
    %c0_119 = arith.constant 0 : index
    %c0_120 = arith.constant 0 : index
    %103 = vector.load %arg12[%c0_118, %c0_119, %c0_120] : memref<1x8x32xf32, #tpu.memory_space<vmem>>, vector<1x8x32xf32>
    %104 = vector.shape_cast %103 : vector<1x8x32xf32> to vector<8x32xf32>
    %105 = vector.shape_cast %102 : vector<8x32xf32> to vector<1x8x32xf32>
    tpu.vector_store %arg12[%c0_118, %c0_119, %c0_120], %105 {strides = array<i32>} : memref<1x8x32xf32, #tpu.memory_space<vmem>>, vector<1x8x32xf32>,
    return
  }
  func.func @transform_0(%arg0: i32) -> (i32, i32, i32) {
    %c0_i32 = arith.constant 0 : i32
    %c0_i32_0 = arith.constant 0 : i32
    %c0_i32_1 = arith.constant 0 : i32
    return %arg0, %c0_i32, %c0_i32_0 : i32, i32, i32
  }
  func.func @transform_1(%arg0: i32) -> (i32, i32, i32) {
    %c0_i32 = arith.constant 0 : i32
    %c0_i32_0 = arith.constant 0 : i32
    %c0_i32_1 = arith.constant 0 : i32
    %c0_i32_2 = arith.constant 0 : i32
    return %c0_i32, %c0_i32_0, %c0_i32_1 : i32, i32, i32
  }
  func.func @transform_2(%arg0: i32) -> (i32, i32) {
    %c0_i32 = arith.constant 0 : i32
    %c0_i32_0 = arith.constant 0 : i32
    %c0_i32_1 = arith.constant 0 : i32
    return %c0_i32, %c0_i32_0 : i32, i32
  }
  func.func @transform_3(%arg0: i32) -> (i32, i32, i32) {
    %c0_i32 = arith.constant 0 : i32
    %c0_i32_0 = arith.constant 0 : i32
    %c0_i32_1 = arith.constant 0 : i32
    %c0_i32_2 = arith.constant 0 : i32
    return %c0_i32, %c0_i32_0, %c0_i32_1 : i32, i32, i32
  }
  func.func @transform_4(%arg0: i32) -> (i32, i32, i32) {
    %c0_i32 = arith.constant 0 : i32
    %c0_i32_0 = arith.constant 0 : i32
    %c0_i32_1 = arith.constant 0 : i32
    %c0_i32_2 = arith.constant 0 : i32
    return %c0_i32, %c0_i32_0, %c0_i32_1 : i32, i32, i32
  }
  func.func @transform_5(%arg0: i32) -> (i32, i32) {
    %c0_i32 = arith.constant 0 : i32
    %c0_i32_0 = arith.constant 0 : i32
    %c0_i32_1 = arith.constant 0 : i32
    return %c0_i32, %c0_i32_0 : i32, i32
  }
  func.func @transform_6(%arg0: i32) -> (i32, i32, i32) {
    %c0_i32 = arith.constant 0 : i32
    %c0_i32_0 = arith.constant 0 : i32
    %c0_i32_1 = arith.constant 0 : i32
    %c0_i32_2 = arith.constant 0 : i32
    return %c0_i32, %c0_i32_0, %c0_i32_1 : i32, i32, i32
  }
  func.func @transform_7(%arg0: i32) -> (i32, i32, i32) {
    %c0_i32 = arith.constant 0 : i32
    %c0_i32_0 = arith.constant 0 : i32
    %c0_i32_1 = arith.constant 0 : i32
    %c0_i32_2 = arith.constant 0 : i32
    return %c0_i32, %c0_i32_0, %c0_i32_1 : i32, i32, i32
  }
  func.func @transform_8(%arg0: i32) -> (i32, i32) {
    %c0_i32 = arith.constant 0 : i32
    %c0_i32_0 = arith.constant 0 : i32
    %c0_i32_1 = arith.constant 0 : i32
    return %c0_i32, %c0_i32_0 : i32, i32
  }
  func.func @transform_9(%arg0: i32) -> (i32, i32) {
    %c0_i32 = arith.constant 0 : i32
    %c0_i32_0 = arith.constant 0 : i32
    %c0_i32_1 = arith.constant 0 : i32
    return %c0_i32, %c0_i32_0 : i32, i32
  }
  func.func @transform_10(%arg0: i32) -> (i32, i32) {
    %c0_i32 = arith.constant 0 : i32
    %c0_i32_0 = arith.constant 0 : i32
    %c0_i32_1 = arith.constant 0 : i32
    return %c0_i32, %c0_i32_0 : i32, i32
  }
  func.func @transform_11(%arg0: i32) -> (i32, i32, i32) {
    %c0_i32 = arith.constant 0 : i32
    %c0_i32_0 = arith.constant 0 : i32
    %c0_i32_1 = arith.constant 0 : i32
    return %arg0, %c0_i32, %c0_i32_0 : i32, i32, i32
  }
}

</mosaic_0001>

<llo_original>
// kernel: conv_stack_forward.1
$region0: #{conv_stack_forward.1}
  #allocation0 [shape = 'u32[]', space=smem, size = 0x4, offset = 0x4, fixed_abs, tag = 'smem constant byte address 0x4 - core index']
  #allocation1 [shape = 'u32[144,128]{1,0:T(1,128)}', space=vmem, size = 0x12000, scoped, tag = 'internal scratch']
  #allocation2 [shape = 'f32[10,16]{1,0:T(8,128)}', space=vmem, size = 0x2000, scoped, tag = 'scratch operand']
  #allocation3 [shape = 'f32[10,64]{1,0:T(8,128)}', space=vmem, size = 0x2000, scoped, tag = 'scratch operand']
  #allocation4 [shape = 'f32[10,32]{1,0:T(8,128)}', space=vmem, size = 0x2000, scoped, tag = 'scratch operand']
  %s0 = inlined_call_operand.vmem [shape: f32[2,8,16], index: 0, kind: input, shape index: {}]
  %s1 = inlined_call_operand.vmem [shape: f32[3,16,64], index: 1, kind: input, shape index: {}]
  %s2 = inlined_call_operand.vmem [shape: f32[1,64], index: 2, kind: input, shape index: {}]
  %s3 = inlined_call_operand.vmem [shape: f32[3,64,32], index: 3, kind: input, shape index: {}]
  %s4 = inlined_call_operand.vmem [shape: f32[3,64,32], index: 4, kind: input, shape index: {}]
  %s5 = inlined_call_operand.vmem [shape: f32[1,32], index: 5, kind: input, shape index: {}]
  %s6 = inlined_call_operand.vmem [shape: f32[3,32,32], index: 6, kind: input, shape index: {}]
  %s7 = inlined_call_operand.vmem [shape: f32[3,32,32], index: 7, kind: input, shape index: {}]
  %s8 = inlined_call_operand.vmem [shape: f32[1,32], index: 8, kind: input, shape index: {}]
  %s9 = inlined_call_operand.vmem [shape: f32[32,32], index: 9, kind: input, shape index: {}]
  %s10 = inlined_call_operand.vmem [shape: f32[1,32], index: 10, kind: input, shape index: {}]
  %s11 = inlined_call_operand.hbm [shape: f32[2,8,32], index: 11, kind: output, shape index: {}]
  %s12 = sld [smem:[#allocation0]]
  $region77: #{conv_stack_forward.1} parent=0
    _
  %s14 = ssub.s32 1, %s12
  %s15 = scalar_select 0, %s14, %s12
  $region1: #{conv_stack_forward.1} parent=0
    #allocation5 [shape = 'u8[8192]{0}', space=vmem, size = 0x2000, scoped, tag = 'output window, operand 0']
    #allocation6 [shape = 's32[2]{0}', space=sflag, size = 0x8, scoped, tag = 'scoped memory for conv_stack_forward.1']
    %16 = vsyncpa [#allocation6], 0
    %s17 = scalar_lea.sflag [#allocation6], 1
    %18 = vsyncpa %s17, 0
    loop: start=0, step=1, limit=4
    $region2: #{conv_stack_forward.1} parent=1 // loop_pre_header
      _
    $region3: #{conv_stack_forward.1} parent=1 // loop_header
      %s20 = sphi 0, %s24
      %p21 = scmp.ge.s32.totalorder %s20, 4
      %s30 = sphi 0, %s32
      %s33 = sphi 0, %s30
      %s34 = sphi 0, %s33
      %s50 = sphi 0, %s34
      %s54 = sphi 0, %s54
      %s56 = sphi 0, %s54
      %s57 = sphi 0, %s56
      %s71 = sphi 0, %s57
      %s75 = sphi 0, %s75
      %s77 = sphi 0, %s75
      %s78 = sphi 0, %s77
      %s92 = sphi 0, %s78
      %s96 = sphi 0, %s96
      %s98 = sphi 0, %s96
      %s99 = sphi 0, %s98
      %s113 = sphi 0, %s99
      %s117 = sphi 0, %s117
      %s119 = sphi 0, %s117
      %s120 = sphi 0, %s119
      %s134 = sphi 0, %s120
      %s138 = sphi 0, %s138
      %s140 = sphi 0, %s138
      %s141 = sphi 0, %s140
      %s155 = sphi 0, %s141
      %s159 = sphi 0, %s159
      %s161 = sphi 0, %s159
      %s162 = sphi 0, %s161
      %s176 = sphi 0, %s162
      %s180 = sphi 0, %s180
      %s182 = sphi 0, %s180
      %s183 = sphi 0, %s182
      %s197 = sphi 0, %s183
      %s201 = sphi 0, %s201
      %s203 = sphi 0, %s201
      %s204 = sphi 0, %s203
      %s218 = sphi 0, %s204
      %s222 = sphi 0, %s222
      %s224 = sphi 0, %s222
      %s225 = sphi 0, %s224
      %s239 = sphi 0, %s225
      %s243 = sphi 0, %s243
      %s245 = sphi 0, %s243
      %s246 = sphi 0, %s245
      %s260 = sphi 0, %s246
      %s266 = sphi 0, %s268
      %s269 = sphi 0, %s266
      %s270 = sphi 0, %s269
      %s286 = sphi 0, %s270
    $region4: #{conv_stack_forward.1} parent=1 // loop_header_branch
      %23 = sbr.rel (%p21) target = $region8
    $region5: #{conv_stack_forward.1} parent=1 // loop_body
      %s25 = ssub.s32 %s20, 1
      %s26 = ssub.s32 %s20, 2
      %s27 = sadd.s32 %s20, 1
      %s28 = ssub.s32 %s20, %s27
      %p29 = scmp.eq.s32.totalorder %s28, 0
      %s31 = sadd.s32 %s30, 1
      %s32 = scalar_select %p29, %s30, %s31
      %p35 = pneg %p29
      %p36 = scmp.eq.s32.totalorder %s20, 1
      %p37 = por %p35, %p36
      %p38 = scmp.ne.s32.totalorder %s30, %s33
      %p39 = scmp.eq.s32.totalorder %s20, 0
      %p40 = por %p38, %p39
      %p41 = scmp.ne.s32.totalorder %s30, %s33
      %p42 = scmp.eq.s32.totalorder %s25, 1
      %p43 = por %p41, %p42
      %p44 = scmp.ne.s32.totalorder %s33, %s34
      %p45 = scmp.eq.s32.totalorder %s25, 0
      %p46 = por %p44, %p45
      %p47 = scmp.ne.s32.totalorder %s33, %s34
      %p48 = scmp.eq.s32.totalorder %s26, 1
      %p49 = por %p47, %p48
      %p51 = scmp.ne.s32.totalorder %s34, %s50
      %p52 = scmp.eq.s32.totalorder %s26, 0
      %p53 = por %p51, %p52
      %s55 = sadd.s32 %s54, 1
      %p58 = scmp.eq.s32.totalorder %s20, 1
      %p59 = scmp.ne.s32.totalorder %s54, %s56
      %p60 = scmp.eq.s32.totalorder %s20, 0
      %p61 = por %p59, %p60
      %p62 = scmp.ne.s32.totalorder %s54, %s56
      %p63 = scmp.eq.s32.totalorder %s25, 1
      %p64 = por %p62, %p63
      %p65 = scmp.ne.s32.totalorder %s56, %s57
      %p66 = scmp.eq.s32.totalorder %s25, 0
      %p67 = por %p65, %p66
      %p68 = scmp.ne.s32.totalorder %s56, %s57
      %p69 = scmp.eq.s32.totalorder %s26, 1
      %p70 = por %p68, %p69
      %p72 = scmp.ne.s32.totalorder %s57, %s71
      %p73 = scmp.eq.s32.totalorder %s26, 0
      %p74 = por %p72, %p73
      %s76 = sadd.s32 %s75, 1
      %p79 = scmp.eq.s32.totalorder %s20, 1
      %p80 = scmp.ne.s32.totalorder %s75, %s77
      %p81 = scmp.eq.s32.totalorder %s20, 0
      %p82 = por %p80, %p81
      %p83 = scmp.ne.s32.totalorder %s75, %s77
      %p84 = scmp.eq.s32.totalorder %s25, 1
      %p85 = por %p83, %p84
      %p86 = scmp.ne.s32.totalorder %s77, %s78
      %p87 = scmp.eq.s32.totalorder %s25, 0
      %p88 = por %p86, %p87
      %p89 = scmp.ne.s32.totalorder %s77, %s78
      %p90 = scmp.eq.s32.totalorder %s26, 1
      %p91 = por %p89, %p90
      %p93 = scmp.ne.s32.totalorder %s78, %s92
      %p94 = scmp.eq.s32.totalorder %s26, 0
      %p95 = por %p93, %p94
      %s97 = sadd.s32 %s96, 1
      %p100 = scmp.eq.s32.totalorder %s20, 1
      %p101 = scmp.ne.s32.totalorder %s96, %s98
      %p102 = scmp.eq.s32.totalorder %s20, 0
      %p103 = por %p101, %p102
      %p104 = scmp.ne.s32.totalorder %s96, %s98
      %p105 = scmp.eq.s32.totalorder %s25, 1
      %p106 = por %p104, %p105
      %p107 = scmp.ne.s32.totalorder %s98, %s99
      %p108 = scmp.eq.s32.totalorder %s25, 0
      %p109 = por %p107, %p108
      %p110 = scmp.ne.s32.totalorder %s98, %s99
      %p111 = scmp.eq.s32.totalorder %s26, 1
      %p112 = por %p110, %p111
      %p114 = scmp.ne.s32.totalorder %s99, %s113
      %p115 = scmp.eq.s32.totalorder %s26, 0
      %p116 = por %p114, %p115
      %s118 = sadd.s32 %s117, 1
      %p121 = scmp.eq.s32.totalorder %s20, 1
      %p122 = scmp.ne.s32.totalorder %s117, %s119
      %p123 = scmp.eq.s32.totalorder %s20, 0
      %p124 = por %p122, %p123
      %p125 = scmp.ne.s32.totalorder %s117, %s119
      %p126 = scmp.eq.s32.totalorder %s25, 1
      %p127 = por %p125, %p126
      %p128 = scmp.ne.s32.totalorder %s119, %s120
      %p129 = scmp.eq.s32.totalorder %s25, 0
      %p130 = por %p128, %p129
      %p131 = scmp.ne.s32.totalorder %s119, %s120
      %p132 = scmp.eq.s32.totalorder %s26, 1
      %p133 = por %p131, %p132
      %p135 = scmp.ne.s32.totalorder %s120, %s134
      %p136 = scmp.eq.s32.totalorder %s26, 0
      %p137 = por %p135, %p136
      %s139 = sadd.s32 %s138, 1
      %p142 = scmp.eq.s32.totalorder %s20, 1
      %p143 = scmp.ne.s32.totalorder %s138, %s140
      %p144 = scmp.eq.s32.totalorder %s20, 0
      %p145 = por %p143, %p144
      %p146 = scmp.ne.s32.totalorder %s138, %s140
      %p147 = scmp.eq.s32.totalorder %s25, 1
      %p148 = por %p146, %p147
      %p149 = scmp.ne.s32.totalorder %s140, %s141
      %p150 = scmp.eq.s32.totalorder %s25, 0
      %p151 = por %p149, %p150
      %p152 = scmp.ne.s32.totalorder %s140, %s141
      %p153 = scmp.eq.s32.totalorder %s26, 1
      %p154 = por %p152, %p153
      %p156 = scmp.ne.s32.totalorder %s141, %s155
      %p157 = scmp.eq.s32.totalorder %s26, 0
      %p158 = por %p156, %p157
      %s160 = sadd.s32 %s159, 1
      %p163 = scmp.eq.s32.totalorder %s20, 1
      %p164 = scmp.ne.s32.totalorder %s159, %s161
      %p165 = scmp.eq.s32.totalorder %s20, 0
      %p166 = por %p164, %p165
      %p167 = scmp.ne.s32.totalorder %s159, %s161
      %p168 = scmp.eq.s32.totalorder %s25, 1
      %p169 = por %p167, %p168
      %p170 = scmp.ne.s32.totalorder %s161, %s162
      %p171 = scmp.eq.s32.totalorder %s25, 0
      %p172 = por %p170, %p171
      %p173 = scmp.ne.s32.totalorder %s161, %s162
      %p174 = scmp.eq.s32.totalorder %s26, 1
      %p175 = por %p173, %p174
      %p177 = scmp.ne.s32.totalorder %s162, %s176
      %p178 = scmp.eq.s32.totalorder %s26, 0
      %p179 = por %p177, %p178
      %s181 = sadd.s32 %s180, 1
      %p184 = scmp.eq.s32.totalorder %s20, 1
      %p185 = scmp.ne.s32.totalorder %s180, %s182
      %p186 = scmp.eq.s32.totalorder %s20, 0
      %p187 = por %p185, %p186
      %p188 = scmp.ne.s32.totalorder %s180, %s182
      %p189 = scmp.eq.s32.totalorder %s25, 1
      %p190 = por %p188, %p189
      %p191 = scmp.ne.s32.totalorder %s182, %s183
      %p192 = scmp.eq.s32.totalorder %s25, 0
      %p193 = por %p191, %p192
      %p194 = scmp.ne.s32.totalorder %s182, %s183
      %p195 = scmp.eq.s32.totalorder %s26, 1
      %p196 = por %p194, %p195
      %p198 = scmp.ne.s32.totalorder %s183, %s197
      %p199 = scmp.eq.s32.totalorder %s26, 0
      %p200 = por %p198, %p199
      %s202 = sadd.s32 %s201, 1
      %p205 = scmp.eq.s32.totalorder %s20, 1
      %p206 = scmp.ne.s32.totalorder %s201, %s203
      %p207 = scmp.eq.s32.totalorder %s20, 0
      %p208 = por %p206, %p207
      %p209 = scmp.ne.s32.totalorder %s201, %s203
      %p210 = scmp.eq.s32.totalorder %s25, 1
      %p211 = por %p209, %p210
      %p212 = scmp.ne.s32.totalorder %s203, %s204
      %p213 = scmp.eq.s32.totalorder %s25, 0
      %p214 = por %p212, %p213
      %p215 = scmp.ne.s32.totalorder %s203, %s204
      %p216 = scmp.eq.s32.totalorder %s26, 1
      %p217 = por %p215, %p216
      %p219 = scmp.ne.s32.totalorder %s204, %s218
      %p220 = scmp.eq.s32.totalorder %s26, 0
      %p221 = por %p219, %p220
      %s223 = sadd.s32 %s222, 1
      %p226 = scmp.eq.s32.totalorder %s20, 1
      %p227 = scmp.ne.s32.totalorder %s222, %s224
      %p228 = scmp.eq.s32.totalorder %s20, 0
      %p229 = por %p227, %p228
      %p230 = scmp.ne.s32.totalorder %s222, %s224
      %p231 = scmp.eq.s32.totalorder %s25, 1
      %p232 = por %p230, %p231
      %p233 = scmp.ne.s32.totalorder %s224, %s225
      %p234 = scmp.eq.s32.totalorder %s25, 0
      %p235 = por %p233, %p234
      %p236 = scmp.ne.s32.totalorder %s224, %s225
      %p237 = scmp.eq.s32.totalorder %s26, 1
      %p238 = por %p236, %p237
      %p240 = scmp.ne.s32.totalorder %s225, %s239
      %p241 = scmp.eq.s32.totalorder %s26, 0
      %p242 = por %p240, %p241
      %s244 = sadd.s32 %s243, 1
      %p247 = scmp.eq.s32.totalorder %s20, 1
      %p248 = scmp.ne.s32.totalorder %s243, %s245
      %p249 = scmp.eq.s32.totalorder %s20, 0
      %p250 = por %p248, %p249
      %p251 = scmp.ne.s32.totalorder %s243, %s245
      %p252 = scmp.eq.s32.totalorder %s25, 1
      %p253 = por %p251, %p252
      %p254 = scmp.ne.s32.totalorder %s245, %s246
      %p255 = scmp.eq.s32.totalorder %s25, 0
      %p256 = por %p254, %p255
      %p257 = scmp.ne.s32.totalorder %s245, %s246
      %p258 = scmp.eq.s32.totalorder %s26, 1
      %p259 = por %p257, %p258
      %p261 = scmp.ne.s32.totalorder %s246, %s260
      %p262 = scmp.eq.s32.totalorder %s26, 0
      %p263 = por %p261, %p262
      %s264 = ssub.s32 %s20, %s27
      %p265 = scmp.eq.s32.totalorder %s264, 0
      %s267 = sadd.s32 %s266, 1
      %s268 = scalar_select %p265, %s266, %s267
      %p271 = pneg %p265
      %p272 = scmp.eq.s32.totalorder %s20, 1
      %p273 = por %p271, %p272
      %p274 = scmp.ne.s32.totalorder %s266, %s269
      %p275 = scmp.eq.s32.totalorder %s20, 0
      %p276 = por %p274, %p275
      %p277 = scmp.ne.s32.totalorder %s266, %s269
      %p278 = scmp.eq.s32.totalorder %s25, 1
      %p279 = por %p277, %p278
      %p280 = scmp.ne.s32.totalorder %s269, %s270
      %p281 = scmp.eq.s32.totalorder %s25, 0
      %p282 = por %p280, %p281
      %p283 = scmp.ne.s32.totalorder %s269, %s270
      %p284 = scmp.eq.s32.totalorder %s26, 1
      %p285 = por %p283, %p284
      %p287 = scmp.ne.s32.totalorder %s270, %s286
      %p288 = scmp.eq.s32.totalorder %s26, 0
      %p289 = por %p287, %p288
      %p290 = scmp.le.s32.totalorder 1, %s20
      %p291 = scmp.lt.s32.totalorder %s20, 3
      %p292 = pnand %p290, %p291
      %p293 = pneg %p292
      // Predicated region
      $region9: #{conv_stack_forward.1} parent=5 // pred_check
        _
      $region10: #{conv_stack_forward.1} parent=5 // pred_check_branch
        %295 = sbr.rel (%p292) target = $region12
      $region11: #{conv_stack_forward.1} parent=5 // pred_region
        %s296 = ssub.s32 %s20, 1
        // Predicated region
        $region13: #{conv_stack_forward.1} parent=11 // pred_check
          %p297 = pneg %p67
        $region14: #{conv_stack_forward.1} parent=11 // pred_check_branch
          %299 = sbr.rel (%p297) target = $region16
        $region15: #{conv_stack_forward.1} parent=11 // pred_region
          _
        $region16: #{conv_stack_forward.1} parent=11 // pred_fallthru
          _
        // Predicated region
        $region17: #{conv_stack_forward.1} parent=11 // pred_check
          %p300 = pneg %p88
        $region18: #{conv_stack_forward.1} parent=11 // pred_check_branch
          %302 = sbr.rel (%p300) target = $region20
        $region19: #{conv_stack_forward.1} parent=11 // pred_region
          _
        $region20: #{conv_stack_forward.1} parent=11 // pred_fallthru
          _
        // Predicated region
        $region21: #{conv_stack_forward.1} parent=11 // pred_check
          %p303 = pneg %p109
        $region22: #{conv_stack_forward.1} parent=11 // pred_check_branch
          %305 = sbr.rel (%p303) target = $region24
        $region23: #{conv_stack_forward.1} parent=11 // pred_region
          _
        $region24: #{conv_stack_forward.1} parent=11 // pred_fallthru
          _
        // Predicated region
        $region25: #{conv_stack_forward.1} parent=11 // pred_check
          %p306 = pneg %p130
        $region26: #{conv_stack_forward.1} parent=11 // pred_check_branch
          %308 = sbr.rel (%p306) target = $region28
        $region27: #{conv_stack_forward.1} parent=11 // pred_region
          _
        $region28: #{conv_stack_forward.1} parent=11 // pred_fallthru
          _
        // Predicated region
        $region29: #{conv_stack_forward.1} parent=11 // pred_check
          %p309 = pneg %p151
        $region30: #{conv_stack_forward.1} parent=11 // pred_check_branch
          %311 = sbr.rel (%p309) target = $region32
        $region31: #{conv_stack_forward.1} parent=11 // pred_region
          _
        $region32: #{conv_stack_forward.1} parent=11 // pred_fallthru
          _
        // Predicated region
        $region33: #{conv_stack_forward.1} parent=11 // pred_check
          %p312 = pneg %p172
        $region34: #{conv_stack_forward.1} parent=11 // pred_check_branch
          %314 = sbr.rel (%p312) target = $region36
        $region35: #{conv_stack_forward.1} parent=11 // pred_region
          _
        $region36: #{conv_stack_forward.1} parent=11 // pred_fallthru
          _
        // Predicated region
        $region37: #{conv_stack_forward.1} parent=11 // pred_check
          %p315 = pneg %p193
        $region38: #{conv_stack_forward.1} parent=11 // pred_check_branch
          %317 = sbr.rel (%p315) target = $region40
        $region39: #{conv_stack_forward.1} parent=11 // pred_region
          _
        $region40: #{conv_stack_forward.1} parent=11 // pred_fallthru
          _
        // Predicated region
        $region41: #{conv_stack_forward.1} parent=11 // pred_check
          %p318 = pneg %p214
        $region42: #{conv_stack_forward.1} parent=11 // pred_check_branch
          %320 = sbr.rel (%p318) target = $region44
        $region43: #{conv_stack_forward.1} parent=11 // pred_region
          _
        $region44: #{conv_stack_forward.1} parent=11 // pred_fallthru
          _
        // Predicated region
        $region45: #{conv_stack_forward.1} parent=11 // pred_check
          %p321 = pneg %p235
        $region46: #{conv_stack_forward.1} parent=11 // pred_check_branch
          %323 = sbr.rel (%p321) target = $region48
        $region47: #{conv_stack_forward.1} parent=11 // pred_region
          _
        $region48: #{conv_stack_forward.1} parent=11 // pred_fallthru
          _
        // Predicated region
        $region49: #{conv_stack_forward.1} parent=11 // pred_check
          %p324 = pneg %p256
        $region50: #{conv_stack_forward.1} parent=11 // pred_check_branch
          %326 = sbr.rel (%p324) target = $region52
        $region51: #{conv_stack_forward.1} parent=11 // pred_region
          _
        $region52: #{conv_stack_forward.1} parent=11 // pred_fallthru
          _
      $region12: #{conv_stack_forward.1} parent=5 // pred_fallthru
        _
      %p327 = scmp.lt.s32.totalorder %s20, 2
      // Predicated region
      $region53: #{conv_stack_forward.1} parent=5 // pred_check
        %p328 = pneg %p327
      $region54: #{conv_stack_forward.1} parent=5 // pred_check_branch
        %330 = sbr.rel (%p328) target = $region56
      $region55: #{conv_stack_forward.1} parent=5 // pred_region
        // Predicated region
        $region57: #{conv_stack_forward.1} parent=55 // pred_check
          %p331 = pneg %p40
        $region58: #{conv_stack_forward.1} parent=55 // pred_check_branch
          %333 = sbr.rel (%p331) target = $region60
        $region59: #{conv_stack_forward.1} parent=55 // pred_region
          %p334 = scmp.lt.s32.totalorder %s20, 1
          %s335 = scalar_select %p334, %s20, 1
          %s336 = smul.addr %s335, 8
          %s337 = scalar_lea.vmem %s0, %s336
        $region60: #{conv_stack_forward.1} parent=55 // pred_fallthru
          _
      $region56: #{conv_stack_forward.1} parent=5 // pred_fallthru
        _
      %p338 = scmp.le.s32.totalorder 1, %s20
      %p339 = scmp.lt.s32.totalorder %s20, 3
      %p340 = pnand %p338, %p339
      %p341 = pneg %p340
      // Predicated region
      $region61: #{conv_stack_forward.1} parent=5 // pred_check
        _
      $region62: #{conv_stack_forward.1} parent=5 // pred_check_branch
        %343 = sbr.rel (%p340) target = $region64
      $region63: #{conv_stack_forward.1} parent=5 // pred_region
        %s344 = ssub.s32 %s20, 1
        %p345 = scmp.lt.s32.totalorder %s25, 1
        %s346 = scalar_select %p345, %s25, 1
        %s347 = smul.addr %s346, 8
        %s348 = scalar_lea.vmem %s0, %s347
        %p349 = pneg %p46
        %p350 = pneg %p43
        %p351 = pneg %p67
        %p352 = pneg %p64
        %p353 = pneg %p88
        %p354 = pneg %p85
        %p355 = pneg %p109
        %p356 = pneg %p106
        %p357 = pneg %p130
        %p358 = pneg %p127
        %p359 = pneg %p151
        %p360 = pneg %p148
        %p361 = pneg %p172
        %p362 = pneg %p169
        %p363 = pneg %p193
        %p364 = pneg %p190
        %p365 = pneg %p214
        %p366 = pneg %p211
        %p367 = pneg %p235
        %p368 = pneg %p232
        %p369 = pneg %p256
        %p370 = pneg %p253
        %p371 = pneg %p282
        %p372 = pneg %p279
        %s373 = sand.u32 %s269, 1
        %s374 = scalar_lea.sflag [#allocation6], %s373
        %s375 = sand.u32 %s269, 1
        %s376 = smul.addr %s375, 8
        %s377 = scalar_lea.vmem [#allocation5], %s376
        %p378 = scmp.lt.s32.totalorder %s25, 1
        %s379 = scalar_select %p378, %s25, 1
        %s380 = smul.addr %s379, 8
        %s381 = scalar_lea.vmem %s0, %s380
        %vm382 = vcmask 130048
        %383 = vst.msk [vmem:[#allocation2] sm:$0xff] %vm382, 0.0
        %vm384 = vcmask 123904
        %385 = vst.msk [vmem:[#allocation2 + $0x8] sm:$0x3] %vm384, 0.0
        %v386 = vld [vmem:[%s381] sm:$0xff]
        %387 = vst.msk [vmem:[#allocation2 + $0x1] sm:$0xff] %vm382, %v386
        %v388 = vld [vmem:[#allocation2] sm:$0xff]
        %v389 = vld [vmem:[%s1] sm:$0xff]
        %v390 = vld [vmem:[%s1 + $0x8] sm:$0xff]
        %v391 = vld [vmem:[#allocation2 + $0x1] sm:$0xff]
        %s392 = scalar_lea.vmem %s1, 16
        %v393 = vld [vmem:[%s392] sm:$0xff]
        %v394 = vld [vmem:[%s392 + $0x8] sm:$0xff]
        %v396 = vsel %vm382, %v391, 0
        %398 = vmatprep.subr.mxu0 0.0
        %399 = vmatpush1.msra.mxu0 0.0
        %400 = vmatprep.subr.mxu0 0.0
        %401 = vmatpush1.msra.mxu0 0.0
        %402 = vmatprep.subr.mxu0 0.0
        %403 = vmatpush1.msra.mxu0 0.0
        %404 = vmatprep.subr.mxu0 0.0
        %405 = vmatpush1.msra.mxu0 0.0
        %406 = vmatprep.subr.mxu0 0.0
        %407 = vmatpush1.msra.mxu0 0.0
        %408 = vmatprep.subr.mxu0 0.0
        %409 = vmatpush1.msra.mxu0 0.0
        %410 = vmatprep.subr.mxu0 0.0
        %411 = vmatpush1.msra.mxu0 0.0
        %412 = vmatprep.subr.mxu0 0.0
        %413 = vmatpush1.msra.mxu0 0.0
        %414 = vmatprep.subr.mxu0 0.0
        %415 = vmatpush1.msra.mxu0 0.0
        %416 = vmatprep.subr.mxu0 0.0
        %417 = vmatpush1.msra.mxu0 0.0
        %418 = vmatprep.subr.mxu0 0.0
        %419 = vmatpush1.msra.mxu0 0.0
        %420 = vmatprep.subr.mxu0 0.0
        %421 = vmatpush1.msra.mxu0 0.0
        %422 = vmatprep.subr.mxu0 0.0
        %423 = vmatpush1.msra.mxu0 0.0
        %424 = vmatprep.subr.mxu0 0.0
        %425 = vmatpush1.msra.mxu0 0.0
        %426 = vmatprep.subr.mxu0 0.0
        %427 = vmatpush1.msra.mxu0 %v394
        %428 = vmatprep.subr.mxu0 0.0
        %429 = vmatpush1.msra.mxu0 %v393
        %430 = vmatprep.subr.mxu0 0.0
        %431 = vmatpush2.msra.mxu0 0.0
        %432 = vmatprep.subr.mxu0 0.0
        %433 = vmatpush2.msra.mxu0 0.0
        %434 = vmatprep.subr.mxu0 0.0
        %435 = vmatpush2.msra.mxu0 0.0
        %436 = vmatprep.subr.mxu0 0.0
        %437 = vmatpush2.msra.mxu0 0.0
        %438 = vmatprep.subr.mxu0 0.0
        %439 = vmatpush2.msra.mxu0 0.0
        %440 = vmatprep.subr.mxu0 0.0
        %441 = vmatpush2.msra.mxu0 0.0
        %442 = vmatprep.subr.mxu0 0.0
        %443 = vmatpush2.msra.mxu0 0.0
        %444 = vmatprep.subr.mxu0 0.0
        %445 = vmatpush2.msra.mxu0 0.0
        %446 = vmatprep.subr.mxu0 0.0
        %447 = vmatpush2.msra.mxu0 0.0
        %448 = vmatprep.subr.mxu0 0.0
        %449 = vmatpush2.msra.mxu0 0.0
        %450 = vmatprep.subr.mxu0 0.0
        %451 = vmatpush2.msra.mxu0 0.0
        %452 = vmatprep.subr.mxu0 0.0
        %453 = vmatpush2.msra.mxu0 0.0
        %454 = vmatprep.subr.mxu0 0.0
        %455 = vmatpush2.msra.mxu0 0.0
        %456 = vmatprep.subr.mxu0 0.0
        %457 = vmatpush2.msra.mxu0 0.0
        %458 = vmatprep.subr.mxu0 0.0
        %459 = vmatpush2.msra.mxu0 0.0
        %460 = vmatprep.subr.mxu0 0.0
        %461 = vmatpush2.msra.mxu0 0.0
        %462 = vmatprep.mubr.f32.mxu0 0.0
        %463 = vmatmul.mubr.f32.gmra.mxu0 %v396
        %v464 = vpop.f32.mrf.mxu0
        %v465 = vadd.f32 0.0, %v464
        %v466 = vpop.f32.mrf.mxu0
        %467 = vdwg.mxu0
        %v469 = vsel %vm382, %v388, 0
        %471 = vmatprep.subr.mxu0 0.0
        %472 = vmatpush1.msra.mxu0 0.0
        %473 = vmatprep.subr.mxu0 0.0
        %474 = vmatpush1.msra.mxu0 0.0
        %475 = vmatprep.subr.mxu0 0.0
        %476 = vmatpush1.msra.mxu0 0.0
        %477 = vmatprep.subr.mxu0 0.0
        %478 = vmatpush1.msra.mxu0 0.0
        %479 = vmatprep.subr.mxu0 0.0
        %480 = vmatpush1.msra.mxu0 0.0
        %481 = vmatprep.subr.mxu0 0.0
        %482 = vmatpush1.msra.mxu0 0.0
        %483 = vmatprep.subr.mxu0 0.0
        %484 = vmatpush1.msra.mxu0 0.0
        %485 = vmatprep.subr.mxu0 0.0
        %486 = vmatpush1.msra.mxu0 0.0
        %487 = vmatprep.subr.mxu0 0.0
        %488 = vmatpush1.msra.mxu0 0.0
        %489 = vmatprep.subr.mxu0 0.0
        %490 = vmatpush1.msra.mxu0 0.0
        %491 = vmatprep.subr.mxu0 0.0
        %492 = vmatpush1.msra.mxu0 0.0
        %493 = vmatprep.subr.mxu0 0.0
        %494 = vmatpush1.msra.mxu0 0.0
        %495 = vmatprep.subr.mxu0 0.0
        %496 = vmatpush1.msra.mxu0 0.0
        %497 = vmatprep.subr.mxu0 0.0
        %498 = vmatpush1.msra.mxu0 0.0
        %499 = vmatprep.subr.mxu0 0.0
        %500 = vmatpush1.msra.mxu0 %v390
        %501 = vmatprep.subr.mxu0 0.0
        %502 = vmatpush1.msra.mxu0 %v389
        %503 = vmatprep.subr.mxu0 0.0
        %504 = vmatpush2.msra.mxu0 0.0
        %505 = vmatprep.subr.mxu0 0.0
        %506 = vmatpush2.msra.mxu0 0.0
        %507 = vmatprep.subr.mxu0 0.0
        %508 = vmatpush2.msra.mxu0 0.0
        %509 = vmatprep.subr.mxu0 0.0
        %510 = vmatpush2.msra.mxu0 0.0
        %511 = vmatprep.subr.mxu0 0.0
        %512 = vmatpush2.msra.mxu0 0.0
        %513 = vmatprep.subr.mxu0 0.0
        %514 = vmatpush2.msra.mxu0 0.0
        %515 = vmatprep.subr.mxu0 0.0
        %516 = vmatpush2.msra.mxu0 0.0
        %517 = vmatprep.subr.mxu0 0.0
        %518 = vmatpush2.msra.mxu0 0.0
        %519 = vmatprep.subr.mxu0 0.0
        %520 = vmatpush2.msra.mxu0 0.0
        %521 = vmatprep.subr.mxu0 0.0
        %522 = vmatpush2.msra.mxu0 0.0
        %523 = vmatprep.subr.mxu0 0.0
        %524 = vmatpush2.msra.mxu0 0.0
        %525 = vmatprep.subr.mxu0 0.0
        %526 = vmatpush2.msra.mxu0 0.0
        %527 = vmatprep.subr.mxu0 0.0
        %528 = vmatpush2.msra.mxu0 0.0
        %529 = vmatprep.subr.mxu0 0.0
        %530 = vmatpush2.msra.mxu0 0.0
        %531 = vmatprep.subr.mxu0 0.0
        %532 = vmatpush2.msra.mxu0 0.0
        %533 = vmatprep.subr.mxu0 0.0
        %534 = vmatpush2.msra.mxu0 0.0
        %535 = vmatprep.mubr.f32.mxu0 0.0
        %536 = vmatmul.mubr.f32.gmra.mxu0 %v469
        %v537 = vpop.f32.mrf.mxu0
        %v538 = vadd.f32 %v465, %v537
        %v539 = vpop.f32.mrf.mxu0
        %540 = vdwg.mxu0
        %v541 = vld [vmem:[#allocation2 + $0x2] sm:$0xff]
        %s542 = scalar_lea.vmem %s1, 32
        %v543 = vld [vmem:[%s542] sm:$0xff]
        %v544 = vld [vmem:[%s542 + $0x8] sm:$0xff]
        %v546 = vsel %vm382, %v541, 0
        %548 = vmatprep.subr.mxu0 0.0
        %549 = vmatpush1.msra.mxu0 0.0
        %550 = vmatprep.subr.mxu0 0.0
        %551 = vmatpush1.msra.mxu0 0.0
        %552 = vmatprep.subr.mxu0 0.0
        %553 = vmatpush1.msra.mxu0 0.0
        %554 = vmatprep.subr.mxu0 0.0
        %555 = vmatpush1.msra.mxu0 0.0
        %556 = vmatprep.subr.mxu0 0.0
        %557 = vmatpush1.msra.mxu0 0.0
        %558 = vmatprep.subr.mxu0 0.0
        %559 = vmatpush1.msra.mxu0 0.0
        %560 = vmatprep.subr.mxu0 0.0
        %561 = vmatpush1.msra.mxu0 0.0
        %562 = vmatprep.subr.mxu0 0.0
        %563 = vmatpush1.msra.mxu0 0.0
        %564 = vmatprep.subr.mxu0 0.0
        %565 = vmatpush1.msra.mxu0 0.0
        %566 = vmatprep.subr.mxu0 0.0
        %567 = vmatpush1.msra.mxu0 0.0
        %568 = vmatprep.subr.mxu0 0.0
        %569 = vmatpush1.msra.mxu0 0.0
        %570 = vmatprep.subr.mxu0 0.0
        %571 = vmatpush1.msra.mxu0 0.0
        %572 = vmatprep.subr.mxu0 0.0
        %573 = vmatpush1.msra.mxu0 0.0
        %574 = vmatprep.subr.mxu0 0.0
        %575 = vmatpush1.msra.mxu0 0.0
        %576 = vmatprep.subr.mxu0 0.0
        %577 = vmatpush1.msra.mxu0 %v544
        %578 = vmatprep.subr.mxu0 0.0
        %579 = vmatpush1.msra.mxu0 %v543
        %580 = vmatprep.subr.mxu0 0.0
        %581 = vmatpush2.msra.mxu0 0.0
        %582 = vmatprep.subr.mxu0 0.0
        %583 = vmatpush2.msra.mxu0 0.0
        %584 = vmatprep.subr.mxu0 0.0
        %585 = vmatpush2.msra.mxu0 0.0
        %586 = vmatprep.subr.mxu0 0.0
        %587 = vmatpush2.msra.mxu0 0.0
        %588 = vmatprep.subr.mxu0 0.0
        %589 = vmatpush2.msra.mxu0 0.0
        %590 = vmatprep.subr.mxu0 0.0
        %591 = vmatpush2.msra.mxu0 0.0
        %592 = vmatprep.subr.mxu0 0.0
        %593 = vmatpush2.msra.mxu0 0.0
        %594 = vmatprep.subr.mxu0 0.0
        %595 = vmatpush2.msra.mxu0 0.0
        %596 = vmatprep.subr.mxu0 0.0
        %597 = vmatpush2.msra.mxu0 0.0
        %598 = vmatprep.subr.mxu0 0.0
        %599 = vmatpush2.msra.mxu0 0.0
        %600 = vmatprep.subr.mxu0 0.0
        %601 = vmatpush2.msra.mxu0 0.0
        %602 = vmatprep.subr.mxu0 0.0
        %603 = vmatpush2.msra.mxu0 0.0
        %604 = vmatprep.subr.mxu0 0.0
        %605 = vmatpush2.msra.mxu0 0.0
        %606 = vmatprep.subr.mxu0 0.0
        %607 = vmatpush2.msra.mxu0 0.0
        %608 = vmatprep.subr.mxu0 0.0
        %609 = vmatpush2.msra.mxu0 0.0
        %610 = vmatprep.subr.mxu0 0.0
        %611 = vmatpush2.msra.mxu0 0.0
        %612 = vmatprep.mubr.f32.mxu0 0.0
        %613 = vmatmul.mubr.f32.gmra.mxu0 %v546
        %v614 = vpop.f32.mrf.mxu0
        %v615 = vadd.f32 0.0, %v614
        %v616 = vpop.f32.mrf.mxu0
        %617 = vdwg.mxu0
        %v618 = vadd.f32 %v538, %v615
        %v619 = vld [vmem:[%s2] sm:$0x1]
        %v621 = vlaneseq
        %v622 = vshrl.u32 %v621, 7
        %v623 = vsub.s32 0, %v622
        %v624 = vrot.slane %v619, %v623
        %v626 = vadd.f32 %v618, %v624
        %v627 = vmax.f32 %v626, 0.0
        %vm628 = vcmask 523264
        %629 = vst.msk [vmem:[#allocation3] sm:$0xff] %vm628, 0.0
        %vm630 = vcmask 517120
        %631 = vst.msk [vmem:[#allocation3 + $0x8] sm:$0x3] %vm630, 0.0
        %632 = vst.msk [vmem:[#allocation3 + $0x1] sm:$0xff] %vm628, %v627
        %v633 = vld [vmem:[#allocation3] sm:$0xff]
        %v634 = vld [vmem:[%s3] sm:$0xff]
        %v635 = vld [vmem:[%s3 + $0x8] sm:$0xff]
        %v636 = vld [vmem:[%s3 + $0x10] sm:$0xff]
        %v637 = vld [vmem:[%s3 + $0x18] sm:$0xff]
        %v638 = vld [vmem:[%s3 + $0x20] sm:$0xff]
        %v639 = vld [vmem:[%s3 + $0x28] sm:$0xff]
        %v640 = vld [vmem:[%s3 + $0x30] sm:$0xff]
        %v641 = vld [vmem:[%s3 + $0x38] sm:$0xff]
        %v642 = vld [vmem:[#allocation3 + $0x1] sm:$0xff]
        %s643 = scalar_lea.vmem %s3, 64
        %v644 = vld [vmem:[%s643] sm:$0xff]
        %v645 = vld [vmem:[%s643 + $0x8] sm:$0xff]
        %v646 = vld [vmem:[%s643 + $0x10] sm:$0xff]
        %v647 = vld [vmem:[%s643 + $0x18] sm:$0xff]
        %v648 = vld [vmem:[%s643 + $0x20] sm:$0xff]
        %v649 = vld [vmem:[%s643 + $0x28] sm:$0xff]
        %v650 = vld [vmem:[%s643 + $0x30] sm:$0xff]
        %v651 = vld [vmem:[%s643 + $0x38] sm:$0xff]
        %v653 = vsel %vm628, %v642, 0
        %655 = vmatprep.subr.mxu0 0.0
        %656 = vmatpush1.msra.mxu0 0.0
        %657 = vmatprep.subr.mxu0 0.0
        %658 = vmatpush1.msra.mxu0 0.0
        %659 = vmatprep.subr.mxu0 0.0
        %660 = vmatpush1.msra.mxu0 0.0
        %661 = vmatprep.subr.mxu0 0.0
        %662 = vmatpush1.msra.mxu0 0.0
        %663 = vmatprep.subr.mxu0 0.0
        %664 = vmatpush1.msra.mxu0 0.0
        %665 = vmatprep.subr.mxu0 0.0
        %666 = vmatpush1.msra.mxu0 0.0
        %667 = vmatprep.subr.mxu0 0.0
        %668 = vmatpush1.msra.mxu0 0.0
        %669 = vmatprep.subr.mxu0 0.0
        %670 = vmatpush1.msra.mxu0 0.0
        %671 = vmatprep.subr.mxu0 0.0
        %672 = vmatpush1.msra.mxu0 %v651
        %673 = vmatprep.subr.mxu0 0.0
        %674 = vmatpush1.msra.mxu0 %v650
        %675 = vmatprep.subr.mxu0 0.0
        %676 = vmatpush1.msra.mxu0 %v649
        %677 = vmatprep.subr.mxu0 0.0
        %678 = vmatpush1.msra.mxu0 %v648
        %679 = vmatprep.subr.mxu0 0.0
        %680 = vmatpush1.msra.mxu0 %v647
        %681 = vmatprep.subr.mxu0 0.0
        %682 = vmatpush1.msra.mxu0 %v646
        %683 = vmatprep.subr.mxu0 0.0
        %684 = vmatpush1.msra.mxu0 %v645
        %685 = vmatprep.subr.mxu0 0.0
        %686 = vmatpush1.msra.mxu0 %v644
        %687 = vmatprep.subr.mxu0 0.0
        %688 = vmatpush2.msra.mxu0 0.0
        %689 = vmatprep.subr.mxu0 0.0
        %690 = vmatpush2.msra.mxu0 0.0
        %691 = vmatprep.subr.mxu0 0.0
        %692 = vmatpush2.msra.mxu0 0.0
        %693 = vmatprep.subr.mxu0 0.0
        %694 = vmatpush2.msra.mxu0 0.0
        %695 = vmatprep.subr.mxu0 0.0
        %696 = vmatpush2.msra.mxu0 0.0
        %697 = vmatprep.subr.mxu0 0.0
        %698 = vmatpush2.msra.mxu0 0.0
        %699 = vmatprep.subr.mxu0 0.0
        %700 = vmatpush2.msra.mxu0 0.0
        %701 = vmatprep.subr.mxu0 0.0
        %702 = vmatpush2.msra.mxu0 0.0
        %703 = vmatprep.subr.mxu0 0.0
        %704 = vmatpush2.msra.mxu0 0.0
        %705 = vmatprep.subr.mxu0 0.0
        %706 = vmatpush2.msra.mxu0 0.0
        %707 = vmatprep.subr.mxu0 0.0
        %708 = vmatpush2.msra.mxu0 0.0
        %709 = vmatprep.subr.mxu0 0.0
        %710 = vmatpush2.msra.mxu0 0.0
        %711 = vmatprep.subr.mxu0 0.0
        %712 = vmatpush2.msra.mxu0 0.0
        %713 = vmatprep.subr.mxu0 0.0
        %714 = vmatpush2.msra.mxu0 0.0
        %715 = vmatprep.subr.mxu0 0.0
        %716 = vmatpush2.msra.mxu0 0.0
        %717 = vmatprep.subr.mxu0 0.0
        %718 = vmatpush2.msra.mxu0 0.0
        %719 = vmatprep.mubr.f32.mxu0 0.0
        %720 = vmatmul.mubr.f32.gmra.mxu0 %v653
        %v721 = vpop.f32.mrf.mxu0
        %v722 = vadd.f32 0.0, %v721
        %v723 = vpop.f32.mrf.mxu0
        %724 = vdwg.mxu0
        %v726 = vsel %vm628, %v633, 0
        %728 = vmatprep.subr.mxu0 0.0
        %729 = vmatpush1.msra.mxu0 0.0
        %730 = vmatprep.subr.mxu0 0.0
        %731 = vmatpush1.msra.mxu0 0.0
        %732 = vmatprep.subr.mxu0 0.0
        %733 = vmatpush1.msra.mxu0 0.0
        %734 = vmatprep.subr.mxu0 0.0
        %735 = vmatpush1.msra.mxu0 0.0
        %736 = vmatprep.subr.mxu0 0.0
        %737 = vmatpush1.msra.mxu0 0.0
        %738 = vmatprep.subr.mxu0 0.0
        %739 = vmatpush1.msra.mxu0 0.0
        %740 = vmatprep.subr.mxu0 0.0
        %741 = vmatpush1.msra.mxu0 0.0
        %742 = vmatprep.subr.mxu0 0.0
        %743 = vmatpush1.msra.mxu0 0.0
        %744 = vmatprep.subr.mxu0 0.0
        %745 = vmatpush1.msra.mxu0 %v641
        %746 = vmatprep.subr.mxu0 0.0
        %747 = vmatpush1.msra.mxu0 %v640
        %748 = vmatprep.subr.mxu0 0.0
        %749 = vmatpush1.msra.mxu0 %v639
        %750 = vmatprep.subr.mxu0 0.0
        %751 = vmatpush1.msra.mxu0 %v638
        %752 = vmatprep.subr.mxu0 0.0
        %753 = vmatpush1.msra.mxu0 %v637
        %754 = vmatprep.subr.mxu0 0.0
        %755 = vmatpush1.msra.mxu0 %v636
        %756 = vmatprep.subr.mxu0 0.0
        %757 = vmatpush1.msra.mxu0 %v635
        %758 = vmatprep.subr.mxu0 0.0
        %759 = vmatpush1.msra.mxu0 %v634
        %760 = vmatprep.subr.mxu0 0.0
        %761 = vmatpush2.msra.mxu0 0.0
        %762 = vmatprep.subr.mxu0 0.0
        %763 = vmatpush2.msra.mxu0 0.0
        %764 = vmatprep.subr.mxu0 0.0
        %765 = vmatpush2.msra.mxu0 0.0
        %766 = vmatprep.subr.mxu0 0.0
        %767 = vmatpush2.msra.mxu0 0.0
        %768 = vmatprep.subr.mxu0 0.0
        %769 = vmatpush2.msra.mxu0 0.0
        %770 = vmatprep.subr.mxu0 0.0
        %771 = vmatpush2.msra.mxu0 0.0
        %772 = vmatprep.subr.mxu0 0.0
        %773 = vmatpush2.msra.mxu0 0.0
        %774 = vmatprep.subr.mxu0 0.0
        %775 = vmatpush2.msra.mxu0 0.0
        %776 = vmatprep.subr.mxu0 0.0
        %777 = vmatpush2.msra.mxu0 0.0
        %778 = vmatprep.subr.mxu0 0.0
        %779 = vmatpush2.msra.mxu0 0.0
        %780 = vmatprep.subr.mxu0 0.0
        %781 = vmatpush2.msra.mxu0 0.0
        %782 = vmatprep.subr.mxu0 0.0
        %783 = vmatpush2.msra.mxu0 0.0
        %784 = vmatprep.subr.mxu0 0.0
        %785 = vmatpush2.msra.mxu0 0.0
        %786 = vmatprep.subr.mxu0 0.0
        %787 = vmatpush2.msra.mxu0 0.0
        %788 = vmatprep.subr.mxu0 0.0
        %789 = vmatpush2.msra.mxu0 0.0
        %790 = vmatprep.subr.mxu0 0.0
        %791 = vmatpush2.msra.mxu0 0.0
        %792 = vmatprep.mubr.f32.mxu0 0.0
        %793 = vmatmul.mubr.f32.gmra.mxu0 %v726
        %v794 = vpop.f32.mrf.mxu0
        %v795 = vadd.f32 %v722, %v794
        %v796 = vpop.f32.mrf.mxu0
        %797 = vdwg.mxu0
        %v798 = vld [vmem:[#allocation3 + $0x2] sm:$0xff]
        %s799 = scalar_lea.vmem %s3, 128
        %v800 = vld [vmem:[%s799] sm:$0xff]
        %v801 = vld [vmem:[%s799 + $0x8] sm:$0xff]
        %v802 = vld [vmem:[%s799 + $0x10] sm:$0xff]
        %v803 = vld [vmem:[%s799 + $0x18] sm:$0xff]
        %v804 = vld [vmem:[%s799 + $0x20] sm:$0xff]
        %v805 = vld [vmem:[%s799 + $0x28] sm:$0xff]
        %v806 = vld [vmem:[%s799 + $0x30] sm:$0xff]
        %v807 = vld [vmem:[%s799 + $0x38] sm:$0xff]
        %v809 = vsel %vm628, %v798, 0
        %811 = vmatprep.subr.mxu0 0.0
        %812 = vmatpush1.msra.mxu0 0.0
        %813 = vmatprep.subr.mxu0 0.0
        %814 = vmatpush1.msra.mxu0 0.0
        %815 = vmatprep.subr.mxu0 0.0
        %816 = vmatpush1.msra.mxu0 0.0
        %817 = vmatprep.subr.mxu0 0.0
        %818 = vmatpush1.msra.mxu0 0.0
        %819 = vmatprep.subr.mxu0 0.0
        %820 = vmatpush1.msra.mxu0 0.0
        %821 = vmatprep.subr.mxu0 0.0
        %822 = vmatpush1.msra.mxu0 0.0
        %823 = vmatprep.subr.mxu0 0.0
        %824 = vmatpush1.msra.mxu0 0.0
        %825 = vmatprep.subr.mxu0 0.0
        %826 = vmatpush1.msra.mxu0 0.0
        %827 = vmatprep.subr.mxu0 0.0
        %828 = vmatpush1.msra.mxu0 %v807
        %829 = vmatprep.subr.mxu0 0.0
        %830 = vmatpush1.msra.mxu0 %v806
        %831 = vmatprep.subr.mxu0 0.0
        %832 = vmatpush1.msra.mxu0 %v805
        %833 = vmatprep.subr.mxu0 0.0
        %834 = vmatpush1.msra.mxu0 %v804
        %835 = vmatprep.subr.mxu0 0.0
        %836 = vmatpush1.msra.mxu0 %v803
        %837 = vmatprep.subr.mxu0 0.0
        %838 = vmatpush1.msra.mxu0 %v802
        %839 = vmatprep.subr.mxu0 0.0
        %840 = vmatpush1.msra.mxu0 %v801
        %841 = vmatprep.subr.mxu0 0.0
        %842 = vmatpush1.msra.mxu0 %v800
        %843 = vmatprep.subr.mxu0 0.0
        %844 = vmatpush2.msra.mxu0 0.0
        %845 = vmatprep.subr.mxu0 0.0
        %846 = vmatpush2.msra.mxu0 0.0
        %847 = vmatprep.subr.mxu0 0.0
        %848 = vmatpush2.msra.mxu0 0.0
        %849 = vmatprep.subr.mxu0 0.0
        %850 = vmatpush2.msra.mxu0 0.0
        %851 = vmatprep.subr.mxu0 0.0
        %852 = vmatpush2.msra.mxu0 0.0
        %853 = vmatprep.subr.mxu0 0.0
        %854 = vmatpush2.msra.mxu0 0.0
        %855 = vmatprep.subr.mxu0 0.0
        %856 = vmatpush2.msra.mxu0 0.0
        %857 = vmatprep.subr.mxu0 0.0
        %858 = vmatpush2.msra.mxu0 0.0
        %859 = vmatprep.subr.mxu0 0.0
        %860 = vmatpush2.msra.mxu0 0.0
        %861 = vmatprep.subr.mxu0 0.0
        %862 = vmatpush2.msra.mxu0 0.0
        %863 = vmatprep.subr.mxu0 0.0
        %864 = vmatpush2.msra.mxu0 0.0
        %865 = vmatprep.subr.mxu0 0.0
        %866 = vmatpush2.msra.mxu0 0.0
        %867 = vmatprep.subr.mxu0 0.0
        %868 = vmatpush2.msra.mxu0 0.0
        %869 = vmatprep.subr.mxu0 0.0
        %870 = vmatpush2.msra.mxu0 0.0
        %871 = vmatprep.subr.mxu0 0.0
        %872 = vmatpush2.msra.mxu0 0.0
        %873 = vmatprep.subr.mxu0 0.0
        %874 = vmatpush2.msra.mxu0 0.0
        %875 = vmatprep.mubr.f32.mxu0 0.0
        %876 = vmatmul.mubr.f32.gmra.mxu0 %v809
        %v877 = vpop.f32.mrf.mxu0
        %v878 = vadd.f32 0.0, %v877
        %v879 = vpop.f32.mrf.mxu0
        %880 = vdwg.mxu0
        %v881 = vadd.f32 %v795, %v878
        %v882 = vld [vmem:[%s4] sm:$0xff]
        %v883 = vld [vmem:[%s4 + $0x8] sm:$0xff]
        %v884 = vld [vmem:[%s4 + $0x10] sm:$0xff]
        %v885 = vld [vmem:[%s4 + $0x18] sm:$0xff]
        %v886 = vld [vmem:[%s4 + $0x20] sm:$0xff]
        %v887 = vld [vmem:[%s4 + $0x28] sm:$0xff]
        %v888 = vld [vmem:[%s4 + $0x30] sm:$0xff]
        %v889 = vld [vmem:[%s4 + $0x38] sm:$0xff]
        %s890 = scalar_lea.vmem %s4, 64
        %v891 = vld [vmem:[%s890] sm:$0xff]
        %v892 = vld [vmem:[%s890 + $0x8] sm:$0xff]
        %v893 = vld [vmem:[%s890 + $0x10] sm:$0xff]
        %v894 = vld [vmem:[%s890 + $0x18] sm:$0xff]
        %v895 = vld [vmem:[%s890 + $0x20] sm:$0xff]
        %v896 = vld [vmem:[%s890 + $0x28] sm:$0xff]
        %v897 = vld [vmem:[%s890 + $0x30] sm:$0xff]
        %v898 = vld [vmem:[%s890 + $0x38] sm:$0xff]
        %899 = vmatprep.subr.mxu0 0.0
        %900 = vmatpush1.msra.mxu0 0.0
        %901 = vmatprep.subr.mxu0 0.0
        %902 = vmatpush1.msra.mxu0 0.0
        %903 = vmatprep.subr.mxu0 0.0
        %904 = vmatpush1.msra.mxu0 0.0
        %905 = vmatprep.subr.mxu0 0.0
        %906 = vmatpush1.msra.mxu0 0.0
        %907 = vmatprep.subr.mxu0 0.0
        %908 = vmatpush1.msra.mxu0 0.0
        %909 = vmatprep.subr.mxu0 0.0
        %910 = vmatpush1.msra.mxu0 0.0
        %911 = vmatprep.subr.mxu0 0.0
        %912 = vmatpush1.msra.mxu0 0.0
        %913 = vmatprep.subr.mxu0 0.0
        %914 = vmatpush1.msra.mxu0 0.0
        %915 = vmatprep.subr.mxu0 0.0
        %916 = vmatpush1.msra.mxu0 %v898
        %917 = vmatprep.subr.mxu0 0.0
        %918 = vmatpush1.msra.mxu0 %v897
        %919 = vmatprep.subr.mxu0 0.0
        %920 = vmatpush1.msra.mxu0 %v896
        %921 = vmatprep.subr.mxu0 0.0
        %922 = vmatpush1.msra.mxu0 %v895
        %923 = vmatprep.subr.mxu0 0.0
        %924 = vmatpush1.msra.mxu0 %v894
        %925 = vmatprep.subr.mxu0 0.0
        %926 = vmatpush1.msra.mxu0 %v893
        %927 = vmatprep.subr.mxu0 0.0
        %928 = vmatpush1.msra.mxu0 %v892
        %929 = vmatprep.subr.mxu0 0.0
        %930 = vmatpush1.msra.mxu0 %v891
        %931 = vmatprep.subr.mxu0 0.0
        %932 = vmatpush2.msra.mxu0 0.0
        %933 = vmatprep.subr.mxu0 0.0
        %934 = vmatpush2.msra.mxu0 0.0
        %935 = vmatprep.subr.mxu0 0.0
        %936 = vmatpush2.msra.mxu0 0.0
        %937 = vmatprep.subr.mxu0 0.0
        %938 = vmatpush2.msra.mxu0 0.0
        %939 = vmatprep.subr.mxu0 0.0
        %940 = vmatpush2.msra.mxu0 0.0
        %941 = vmatprep.subr.mxu0 0.0
        %942 = vmatpush2.msra.mxu0 0.0
        %943 = vmatprep.subr.mxu0 0.0
        %944 = vmatpush2.msra.mxu0 0.0
        %945 = vmatprep.subr.mxu0 0.0
        %946 = vmatpush2.msra.mxu0 0.0
        %947 = vmatprep.subr.mxu0 0.0
        %948 = vmatpush2.msra.mxu0 0.0
        %949 = vmatprep.subr.mxu0 0.0
        %950 = vmatpush2.msra.mxu0 0.0
        %951 = vmatprep.subr.mxu0 0.0
        %952 = vmatpush2.msra.mxu0 0.0
        %953 = vmatprep.subr.mxu0 0.0
        %954 = vmatpush2.msra.mxu0 0.0
        %955 = vmatprep.subr.mxu0 0.0
        %956 = vmatpush2.msra.mxu0 0.0
        %957 = vmatprep.subr.mxu0 0.0
        %958 = vmatpush2.msra.mxu0 0.0
        %959 = vmatprep.subr.mxu0 0.0
        %960 = vmatpush2.msra.mxu0 0.0
        %961 = vmatprep.subr.mxu0 0.0
        %962 = vmatpush2.msra.mxu0 0.0
        %963 = vmatprep.mubr.f32.mxu0 0.0
        %964 = vmatmul.mubr.f32.gmra.mxu0 %v653
        %v965 = vpop.f32.mrf.mxu0
        %v966 = vadd.f32 0.0, %v965
        %v967 = vpop.f32.mrf.mxu0
        %968 = vdwg.mxu0
        %969 = vmatprep.subr.mxu0 0.0
        %970 = vmatpush1.msra.mxu0 0.0
        %971 = vmatprep.subr.mxu0 0.0
        %972 = vmatpush1.msra.mxu0 0.0
        %973 = vmatprep.subr.mxu0 0.0
        %974 = vmatpush1.msra.mxu0 0.0
        %975 = vmatprep.subr.mxu0 0.0
        %976 = vmatpush1.msra.mxu0 0.0
        %977 = vmatprep.subr.mxu0 0.0
        %978 = vmatpush1.msra.mxu0 0.0
        %979 = vmatprep.subr.mxu0 0.0
        %980 = vmatpush1.msra.mxu0 0.0
        %981 = vmatprep.subr.mxu0 0.0
        %982 = vmatpush1.msra.mxu0 0.0
        %983 = vmatprep.subr.mxu0 0.0
        %984 = vmatpush1.msra.mxu0 0.0
        %985 = vmatprep.subr.mxu0 0.0
        %986 = vmatpush1.msra.mxu0 %v889
        %987 = vmatprep.subr.mxu0 0.0
        %988 = vmatpush1.msra.mxu0 %v888
        %989 = vmatprep.subr.mxu0 0.0
        %990 = vmatpush1.msra.mxu0 %v887
        %991 = vmatprep.subr.mxu0 0.0
        %992 = vmatpush1.msra.mxu0 %v886
        %993 = vmatprep.subr.mxu0 0.0
        %994 = vmatpush1.msra.mxu0 %v885
        %995 = vmatprep.subr.mxu0 0.0
        %996 = vmatpush1.msra.mxu0 %v884
        %997 = vmatprep.subr.mxu0 0.0
        %998 = vmatpush1.msra.mxu0 %v883
        %999 = vmatprep.subr.mxu0 0.0
        %1000 = vmatpush1.msra.mxu0 %v882
        %1001 = vmatprep.subr.mxu0 0.0
        %1002 = vmatpush2.msra.mxu0 0.0
        %1003 = vmatprep.subr.mxu0 0.0
        %1004 = vmatpush2.msra.mxu0 0.0
        %1005 = vmatprep.subr.mxu0 0.0
        %1006 = vmatpush2.msra.mxu0 0.0
        %1007 = vmatprep.subr.mxu0 0.0
        %1008 = vmatpush2.msra.mxu0 0.0
        %1009 = vmatprep.subr.mxu0 0.0
        %1010 = vmatpush2.msra.mxu0 0.0
        %1011 = vmatprep.subr.mxu0 0.0
        %1012 = vmatpush2.msra.mxu0 0.0
        %1013 = vmatprep.subr.mxu0 0.0
        %1014 = vmatpush2.msra.mxu0 0.0
        %1015 = vmatprep.subr.mxu0 0.0
        %1016 = vmatpush2.msra.mxu0 0.0
        %1017 = vmatprep.subr.mxu0 0.0
        %1018 = vmatpush2.msra.mxu0 0.0
        %1019 = vmatprep.subr.mxu0 0.0
        %1020 = vmatpush2.msra.mxu0 0.0
        %1021 = vmatprep.subr.mxu0 0.0
        %1022 = vmatpush2.msra.mxu0 0.0
        %1023 = vmatprep.subr.mxu0 0.0
        %1024 = vmatpush2.msra.mxu0 0.0
        %1025 = vmatprep.subr.mxu0 0.0
        %1026 = vmatpush2.msra.mxu0 0.0
        %1027 = vmatprep.subr.mxu0 0.0
        %1028 = vmatpush2.msra.mxu0 0.0
        %1029 = vmatprep.subr.mxu0 0.0
        %1030 = vmatpush2.msra.mxu0 0.0
        %1031 = vmatprep.subr.mxu0 0.0
        %1032 = vmatpush2.msra.mxu0 0.0
        %1033 = vmatprep.mubr.f32.mxu0 0.0
        %1034 = vmatmul.mubr.f32.gmra.mxu0 %v726
        %v1035 = vpop.f32.mrf.mxu0
        %v1036 = vadd.f32 %v966, %v1035
        %v1037 = vpop.f32.mrf.mxu0
        %1038 = vdwg.mxu0
        %s1039 = scalar_lea.vmem %s4, 128
        %v1040 = vld [vmem:[%s1039] sm:$0xff]
        %v1041 = vld [vmem:[%s1039 + $0x8] sm:$0xff]
        %v1042 = vld [vmem:[%s1039 + $0x10] sm:$0xff]
        %v1043 = vld [vmem:[%s1039 + $0x18] sm:$0xff]
        %v1044 = vld [vmem:[%s1039 + $0x20] sm:$0xff]
        %v1045 = vld [vmem:[%s1039 + $0x28] sm:$0xff]
        %v1046 = vld [vmem:[%s1039 + $0x30] sm:$0xff]
        %v1047 = vld [vmem:[%s1039 + $0x38] sm:$0xff]
        %1048 = vmatprep.subr.mxu0 0.0
        %1049 = vmatpush1.msra.mxu0 0.0
        %1050 = vmatprep.subr.mxu0 0.0
        %1051 = vmatpush1.msra.mxu0 0.0
        %1052 = vmatprep.subr.mxu0 0.0
        %1053 = vmatpush1.msra.mxu0 0.0
        %1054 = vmatprep.subr.mxu0 0.0
        %1055 = vmatpush1.msra.mxu0 0.0
        %1056 = vmatprep.subr.mxu0 0.0
        %1057 = vmatpush1.msra.mxu0 0.0
        %1058 = vmatprep.subr.mxu0 0.0
        %1059 = vmatpush1.msra.mxu0 0.0
        %1060 = vmatprep.subr.mxu0 0.0
        %1061 = vmatpush1.msra.mxu0 0.0
        %1062 = vmatprep.subr.mxu0 0.0
        %1063 = vmatpush1.msra.mxu0 0.0
        %1064 = vmatprep.subr.mxu0 0.0
        %1065 = vmatpush1.msra.mxu0 %v1047
        %1066 = vmatprep.subr.mxu0 0.0
        %1067 = vmatpush1.msra.mxu0 %v1046
        %1068 = vmatprep.subr.mxu0 0.0
        %1069 = vmatpush1.msra.mxu0 %v1045
        %1070 = vmatprep.subr.mxu0 0.0
        %1071 = vmatpush1.msra.mxu0 %v1044
        %1072 = vmatprep.subr.mxu0 0.0
        %1073 = vmatpush1.msra.mxu0 %v1043
        %1074 = vmatprep.subr.mxu0 0.0
        %1075 = vmatpush1.msra.mxu0 %v1042
        %1076 = vmatprep.subr.mxu0 0.0
        %1077 = vmatpush1.msra.mxu0 %v1041
        %1078 = vmatprep.subr.mxu0 0.0
        %1079 = vmatpush1.msra.mxu0 %v1040
        %1080 = vmatprep.subr.mxu0 0.0
        %1081 = vmatpush2.msra.mxu0 0.0
        %1082 = vmatprep.subr.mxu0 0.0
        %1083 = vmatpush2.msra.mxu0 0.0
        %1084 = vmatprep.subr.mxu0 0.0
        %1085 = vmatpush2.msra.mxu0 0.0
        %1086 = vmatprep.subr.mxu0 0.0
        %1087 = vmatpush2.msra.mxu0 0.0
        %1088 = vmatprep.subr.mxu0 0.0
        %1089 = vmatpush2.msra.mxu0 0.0
        %1090 = vmatprep.subr.mxu0 0.0
        %1091 = vmatpush2.msra.mxu0 0.0
        %1092 = vmatprep.subr.mxu0 0.0
        %1093 = vmatpush2.msra.mxu0 0.0
        %1094 = vmatprep.subr.mxu0 0.0
        %1095 = vmatpush2.msra.mxu0 0.0
        %1096 = vmatprep.subr.mxu0 0.0
        %1097 = vmatpush2.msra.mxu0 0.0
        %1098 = vmatprep.subr.mxu0 0.0
        %1099 = vmatpush2.msra.mxu0 0.0
        %1100 = vmatprep.subr.mxu0 0.0
        %1101 = vmatpush2.msra.mxu0 0.0
        %1102 = vmatprep.subr.mxu0 0.0
        %1103 = vmatpush2.msra.mxu0 0.0
        %1104 = vmatprep.subr.mxu0 0.0
        %1105 = vmatpush2.msra.mxu0 0.0
        %1106 = vmatprep.subr.mxu0 0.0
        %1107 = vmatpush2.msra.mxu0 0.0
        %1108 = vmatprep.subr.mxu0 0.0
        %1109 = vmatpush2.msra.mxu0 0.0
        %1110 = vmatprep.subr.mxu0 0.0
        %1111 = vmatpush2.msra.mxu0 0.0
        %1112 = vmatprep.mubr.f32.mxu0 0.0
        %1113 = vmatmul.mubr.f32.gmra.mxu0 %v809
        %v1114 = vpop.f32.mrf.mxu0
        %v1115 = vadd.f32 0.0, %v1114
        %v1116 = vpop.f32.mrf.mxu0
        %1117 = vdwg.mxu0
        %v1118 = vadd.f32 %v1036, %v1115
        %v1119 = vmax.f32 %v881, %v1118
        %v1120 = vld [vmem:[%s5] sm:$0x1]
        %v1122 = vlaneseq
        %v1123 = vshrl.u32 %v1122, 7
        %v1124 = vsub.s32 0, %v1123
        %v1125 = vrot.slane %v1120, %v1124
        %v1127 = vadd.f32 %v1119, %v1125
        %v1128 = vmax.f32 %v1127, 0.0
        %vm1129 = vcmask 261120
        %1130 = vst.msk [vmem:[#allocation4] sm:$0xff] %vm1129, 0.0
        %vm1131 = vcmask 254976
        %1132 = vst.msk [vmem:[#allocation4 + $0x8] sm:$0x3] %vm1131, 0.0
        %1133 = vst.msk [vmem:[#allocation4 + $0x1] sm:$0xff] %vm1129, %v1128
        %v1134 = vld [vmem:[#allocation4] sm:$0xff]
        %v1135 = vld [vmem:[%s6] sm:$0xff]
        %v1136 = vld [vmem:[%s6 + $0x8] sm:$0xff]
        %v1137 = vld [vmem:[%s6 + $0x10] sm:$0xff]
        %v1138 = vld [vmem:[%s6 + $0x18] sm:$0xff]
        %v1139 = vld [vmem:[#allocation4 + $0x1] sm:$0xff]
        %s1140 = scalar_lea.vmem %s6, 32
        %v1141 = vld [vmem:[%s1140] sm:$0xff]
        %v1142 = vld [vmem:[%s1140 + $0x8] sm:$0xff]
        %v1143 = vld [vmem:[%s1140 + $0x10] sm:$0xff]
        %v1144 = vld [vmem:[%s1140 + $0x18] sm:$0xff]
        %v1146 = vsel %vm1129, %v1139, 0
        %1148 = vmatprep.subr.mxu0 0.0
        %1149 = vmatpush1.msra.mxu0 0.0
        %1150 = vmatprep.subr.mxu0 0.0
        %1151 = vmatpush1.msra.mxu0 0.0
        %1152 = vmatprep.subr.mxu0 0.0
        %1153 = vmatpush1.msra.mxu0 0.0
        %1154 = vmatprep.subr.mxu0 0.0
        %1155 = vmatpush1.msra.mxu0 0.0
        %1156 = vmatprep.subr.mxu0 0.0
        %1157 = vmatpush1.msra.mxu0 0.0
        %1158 = vmatprep.subr.mxu0 0.0
        %1159 = vmatpush1.msra.mxu0 0.0
        %1160 = vmatprep.subr.mxu0 0.0
        %1161 = vmatpush1.msra.mxu0 0.0
        %1162 = vmatprep.subr.mxu0 0.0
        %1163 = vmatpush1.msra.mxu0 0.0
        %1164 = vmatprep.subr.mxu0 0.0
        %1165 = vmatpush1.msra.mxu0 0.0
        %1166 = vmatprep.subr.mxu0 0.0
        %1167 = vmatpush1.msra.mxu0 0.0
        %1168 = vmatprep.subr.mxu0 0.0
        %1169 = vmatpush1.msra.mxu0 0.0
        %1170 = vmatprep.subr.mxu0 0.0
        %1171 = vmatpush1.msra.mxu0 0.0
        %1172 = vmatprep.subr.mxu0 0.0
        %1173 = vmatpush1.msra.mxu0 %v1144
        %1174 = vmatprep.subr.mxu0 0.0
        %1175 = vmatpush1.msra.mxu0 %v1143
        %1176 = vmatprep.subr.mxu0 0.0
        %1177 = vmatpush1.msra.mxu0 %v1142
        %1178 = vmatprep.subr.mxu0 0.0
        %1179 = vmatpush1.msra.mxu0 %v1141
        %1180 = vmatprep.subr.mxu0 0.0
        %1181 = vmatpush2.msra.mxu0 0.0
        %1182 = vmatprep.subr.mxu0 0.0
        %1183 = vmatpush2.msra.mxu0 0.0
        %1184 = vmatprep.subr.mxu0 0.0
        %1185 = vmatpush2.msra.mxu0 0.0
        %1186 = vmatprep.subr.mxu0 0.0
        %1187 = vmatpush2.msra.mxu0 0.0
        %1188 = vmatprep.subr.mxu0 0.0
        %1189 = vmatpush2.msra.mxu0 0.0
        %1190 = vmatprep.subr.mxu0 0.0
        %1191 = vmatpush2.msra.mxu0 0.0
        %1192 = vmatprep.subr.mxu0 0.0
        %1193 = vmatpush2.msra.mxu0 0.0
        %1194 = vmatprep.subr.mxu0 0.0
        %1195 = vmatpush2.msra.mxu0 0.0
        %1196 = vmatprep.subr.mxu0 0.0
        %1197 = vmatpush2.msra.mxu0 0.0
        %1198 = vmatprep.subr.mxu0 0.0
        %1199 = vmatpush2.msra.mxu0 0.0
        %1200 = vmatprep.subr.mxu0 0.0
        %1201 = vmatpush2.msra.mxu0 0.0
        %1202 = vmatprep.subr.mxu0 0.0
        %1203 = vmatpush2.msra.mxu0 0.0
        %1204 = vmatprep.subr.mxu0 0.0
        %1205 = vmatpush2.msra.mxu0 0.0
        %1206 = vmatprep.subr.mxu0 0.0
        %1207 = vmatpush2.msra.mxu0 0.0
        %1208 = vmatprep.subr.mxu0 0.0
        %1209 = vmatpush2.msra.mxu0 0.0
        %1210 = vmatprep.subr.mxu0 0.0
        %1211 = vmatpush2.msra.mxu0 0.0
        %1212 = vmatprep.mubr.f32.mxu0 0.0
        %1213 = vmatmul.mubr.f32.gmra.mxu0 %v1146
        %v1214 = vpop.f32.mrf.mxu0
        %v1215 = vadd.f32 0.0, %v1214
        %v1216 = vpop.f32.mrf.mxu0
        %1217 = vdwg.mxu0
        %v1219 = vsel %vm1129, %v1134, 0
        %1221 = vmatprep.subr.mxu0 0.0
        %1222 = vmatpush1.msra.mxu0 0.0
        %1223 = vmatprep.subr.mxu0 0.0
        %1224 = vmatpush1.msra.mxu0 0.0
        %1225 = vmatprep.subr.mxu0 0.0
        %1226 = vmatpush1.msra.mxu0 0.0
        %1227 = vmatprep.subr.mxu0 0.0
        %1228 = vmatpush1.msra.mxu0 0.0
        %1229 = vmatprep.subr.mxu0 0.0
        %1230 = vmatpush1.msra.mxu0 0.0
        %1231 = vmatprep.subr.mxu0 0.0
        %1232 = vmatpush1.msra.mxu0 0.0
        %1233 = vmatprep.subr.mxu0 0.0
        %1234 = vmatpush1.msra.mxu0 0.0
        %1235 = vmatprep.subr.mxu0 0.0
        %1236 = vmatpush1.msra.mxu0 0.0
        %1237 = vmatprep.subr.mxu0 0.0
        %1238 = vmatpush1.msra.mxu0 0.0
        %1239 = vmatprep.subr.mxu0 0.0
        %1240 = vmatpush1.msra.mxu0 0.0
        %1241 = vmatprep.subr.mxu0 0.0
        %1242 = vmatpush1.msra.mxu0 0.0
        %1243 = vmatprep.subr.mxu0 0.0
        %1244 = vmatpush1.msra.mxu0 0.0
        %1245 = vmatprep.subr.mxu0 0.0
        %1246 = vmatpush1.msra.mxu0 %v1138
        %1247 = vmatprep.subr.mxu0 0.0
        %1248 = vmatpush1.msra.mxu0 %v1137
        %1249 = vmatprep.subr.mxu0 0.0
        %1250 = vmatpush1.msra.mxu0 %v1136
        %1251 = vmatprep.subr.mxu0 0.0
        %1252 = vmatpush1.msra.mxu0 %v1135
        %1253 = vmatprep.subr.mxu0 0.0
        %1254 = vmatpush2.msra.mxu0 0.0
        %1255 = vmatprep.subr.mxu0 0.0
        %1256 = vmatpush2.msra.mxu0 0.0
        %1257 = vmatprep.subr.mxu0 0.0
        %1258 = vmatpush2.msra.mxu0 0.0
        %1259 = vmatprep.subr.mxu0 0.0
        %1260 = vmatpush2.msra.mxu0 0.0
        %1261 = vmatprep.subr.mxu0 0.0
        %1262 = vmatpush2.msra.mxu0 0.0
        %1263 = vmatprep.subr.mxu0 0.0
        %1264 = vmatpush2.msra.mxu0 0.0
        %1265 = vmatprep.subr.mxu0 0.0
        %1266 = vmatpush2.msra.mxu0 0.0
        %1267 = vmatprep.subr.mxu0 0.0
        %1268 = vmatpush2.msra.mxu0 0.0
        %1269 = vmatprep.subr.mxu0 0.0
        %1270 = vmatpush2.msra.mxu0 0.0
        %1271 = vmatprep.subr.mxu0 0.0
        %1272 = vmatpush2.msra.mxu0 0.0
        %1273 = vmatprep.subr.mxu0 0.0
        %1274 = vmatpush2.msra.mxu0 0.0
        %1275 = vmatprep.subr.mxu0 0.0
        %1276 = vmatpush2.msra.mxu0 0.0
        %1277 = vmatprep.subr.mxu0 0.0
        %1278 = vmatpush2.msra.mxu0 0.0
        %1279 = vmatprep.subr.mxu0 0.0
        %1280 = vmatpush2.msra.mxu0 0.0
        %1281 = vmatprep.subr.mxu0 0.0
        %1282 = vmatpush2.msra.mxu0 0.0
        %1283 = vmatprep.subr.mxu0 0.0
        %1284 = vmatpush2.msra.mxu0 0.0
        %1285 = vmatprep.mubr.f32.mxu0 0.0
        %1286 = vmatmul.mubr.f32.gmra.mxu0 %v1219
        %v1287 = vpop.f32.mrf.mxu0
        %v1288 = vadd.f32 %v1215, %v1287
        %v1289 = vpop.f32.mrf.mxu0
        %1290 = vdwg.mxu0
        %v1291 = vld [vmem:[#allocation4 + $0x2] sm:$0xff]
        %s1292 = scalar_lea.vmem %s6, 64
        %v1293 = vld [vmem:[%s1292] sm:$0xff]
        %v1294 = vld [vmem:[%s1292 + $0x8] sm:$0xff]
        %v1295 = vld [vmem:[%s1292 + $0x10] sm:$0xff]
        %v1296 = vld [vmem:[%s1292 + $0x18] sm:$0xff]
        %v1298 = vsel %vm1129, %v1291, 0
        %1300 = vmatprep.subr.mxu0 0.0
        %1301 = vmatpush1.msra.mxu0 0.0
        %1302 = vmatprep.subr.mxu0 0.0
        %1303 = vmatpush1.msra.mxu0 0.0
        %1304 = vmatprep.subr.mxu0 0.0
        %1305 = vmatpush1.msra.mxu0 0.0
        %1306 = vmatprep.subr.mxu0 0.0
        %1307 = vmatpush1.msra.mxu0 0.0
        %1308 = vmatprep.subr.mxu0 0.0
        %1309 = vmatpush1.msra.mxu0 0.0
        %1310 = vmatprep.subr.mxu0 0.0
        %1311 = vmatpush1.msra.mxu0 0.0
        %1312 = vmatprep.subr.mxu0 0.0
        %1313 = vmatpush1.msra.mxu0 0.0
        %1314 = vmatprep.subr.mxu0 0.0
        %1315 = vmatpush1.msra.mxu0 0.0
        %1316 = vmatprep.subr.mxu0 0.0
        %1317 = vmatpush1.msra.mxu0 0.0
        %1318 = vmatprep.subr.mxu0 0.0
        %1319 = vmatpush1.msra.mxu0 0.0
        %1320 = vmatprep.subr.mxu0 0.0
        %1321 = vmatpush1.msra.mxu0 0.0
        %1322 = vmatprep.subr.mxu0 0.0
        %1323 = vmatpush1.msra.mxu0 0.0
        %1324 = vmatprep.subr.mxu0 0.0
        %1325 = vmatpush1.msra.mxu0 %v1296
        %1326 = vmatprep.subr.mxu0 0.0
        %1327 = vmatpush1.msra.mxu0 %v1295
        %1328 = vmatprep.subr.mxu0 0.0
        %1329 = vmatpush1.msra.mxu0 %v1294
        %1330 = vmatprep.subr.mxu0 0.0
        %1331 = vmatpush1.msra.mxu0 %v1293
        %1332 = vmatprep.subr.mxu0 0.0
        %1333 = vmatpush2.msra.mxu0 0.0
        %1334 = vmatprep.subr.mxu0 0.0
        %1335 = vmatpush2.msra.mxu0 0.0
        %1336 = vmatprep.subr.mxu0 0.0
        %1337 = vmatpush2.msra.mxu0 0.0
        %1338 = vmatprep.subr.mxu0 0.0
        %1339 = vmatpush2.msra.mxu0 0.0
        %1340 = vmatprep.subr.mxu0 0.0
        %1341 = vmatpush2.msra.mxu0 0.0
        %1342 = vmatprep.subr.mxu0 0.0
        %1343 = vmatpush2.msra.mxu0 0.0
        %1344 = vmatprep.subr.mxu0 0.0
        %1345 = vmatpush2.msra.mxu0 0.0
        %1346 = vmatprep.subr.mxu0 0.0
        %1347 = vmatpush2.msra.mxu0 0.0
        %1348 = vmatprep.subr.mxu0 0.0
        %1349 = vmatpush2.msra.mxu0 0.0
        %1350 = vmatprep.subr.mxu0 0.0
        %1351 = vmatpush2.msra.mxu0 0.0
        %1352 = vmatprep.subr.mxu0 0.0
        %1353 = vmatpush2.msra.mxu0 0.0
        %1354 = vmatprep.subr.mxu0 0.0
        %1355 = vmatpush2.msra.mxu0 0.0
        %1356 = vmatprep.subr.mxu0 0.0
        %1357 = vmatpush2.msra.mxu0 0.0
        %1358 = vmatprep.subr.mxu0 0.0
        %1359 = vmatpush2.msra.mxu0 0.0
        %1360 = vmatprep.subr.mxu0 0.0
        %1361 = vmatpush2.msra.mxu0 0.0
        %1362 = vmatprep.subr.mxu0 0.0
        %1363 = vmatpush2.msra.mxu0 0.0
        %1364 = vmatprep.mubr.f32.mxu0 0.0
        %1365 = vmatmul.mubr.f32.gmra.mxu0 %v1298
        %v1366 = vpop.f32.mrf.mxu0
        %v1367 = vadd.f32 0.0, %v1366
        %v1368 = vpop.f32.mrf.mxu0
        %1369 = vdwg.mxu0
        %v1370 = vadd.f32 %v1288, %v1367
        %v1371 = vld [vmem:[%s7] sm:$0xff]
        %v1372 = vld [vmem:[%s7 + $0x8] sm:$0xff]
        %v1373 = vld [vmem:[%s7 + $0x10] sm:$0xff]
        %v1374 = vld [vmem:[%s7 + $0x18] sm:$0xff]
        %s1375 = scalar_lea.vmem %s7, 32
        %v1376 = vld [vmem:[%s1375] sm:$0xff]
        %v1377 = vld [vmem:[%s1375 + $0x8] sm:$0xff]
        %v1378 = vld [vmem:[%s1375 + $0x10] sm:$0xff]
        %v1379 = vld [vmem:[%s1375 + $0x18] sm:$0xff]
        %1380 = vmatprep.subr.mxu0 0.0
        %1381 = vmatpush1.msra.mxu0 0.0
        %1382 = vmatprep.subr.mxu0 0.0
        %1383 = vmatpush1.msra.mxu0 0.0
        %1384 = vmatprep.subr.mxu0 0.0
        %1385 = vmatpush1.msra.mxu0 0.0
        %1386 = vmatprep.subr.mxu0 0.0
        %1387 = vmatpush1.msra.mxu0 0.0
        %1388 = vmatprep.subr.mxu0 0.0
        %1389 = vmatpush1.msra.mxu0 0.0
        %1390 = vmatprep.subr.mxu0 0.0
        %1391 = vmatpush1.msra.mxu0 0.0
        %1392 = vmatprep.subr.mxu0 0.0
        %1393 = vmatpush1.msra.mxu0 0.0
        %1394 = vmatprep.subr.mxu0 0.0
        %1395 = vmatpush1.msra.mxu0 0.0
        %1396 = vmatprep.subr.mxu0 0.0
        %1397 = vmatpush1.msra.mxu0 0.0
        %1398 = vmatprep.subr.mxu0 0.0
        %1399 = vmatpush1.msra.mxu0 0.0
        %1400 = vmatprep.subr.mxu0 0.0
        %1401 = vmatpush1.msra.mxu0 0.0
        %1402 = vmatprep.subr.mxu0 0.0
        %1403 = vmatpush1.msra.mxu0 0.0
        %1404 = vmatprep.subr.mxu0 0.0
        %1405 = vmatpush1.msra.mxu0 %v1379
        %1406 = vmatprep.subr.mxu0 0.0
        %1407 = vmatpush1.msra.mxu0 %v1378
        %1408 = vmatprep.subr.mxu0 0.0
        %1409 = vmatpush1.msra.mxu0 %v1377
        %1410 = vmatprep.subr.mxu0 0.0
        %1411 = vmatpush1.msra.mxu0 %v1376
        %1412 = vmatprep.subr.mxu0 0.0
        %1413 = vmatpush2.msra.mxu0 0.0
        %1414 = vmatprep.subr.mxu0 0.0
        %1415 = vmatpush2.msra.mxu0 0.0
        %1416 = vmatprep.subr.mxu0 0.0
        %1417 = vmatpush2.msra.mxu0 0.0
        %1418 = vmatprep.subr.mxu0 0.0
        %1419 = vmatpush2.msra.mxu0 0.0
        %1420 = vmatprep.subr.mxu0 0.0
        %1421 = vmatpush2.msra.mxu0 0.0
        %1422 = vmatprep.subr.mxu0 0.0
        %1423 = vmatpush2.msra.mxu0 0.0
        %1424 = vmatprep.subr.mxu0 0.0
        %1425 = vmatpush2.msra.mxu0 0.0
        %1426 = vmatprep.subr.mxu0 0.0
        %1427 = vmatpush2.msra.mxu0 0.0
        %1428 = vmatprep.subr.mxu0 0.0
        %1429 = vmatpush2.msra.mxu0 0.0
        %1430 = vmatprep.subr.mxu0 0.0
        %1431 = vmatpush2.msra.mxu0 0.0
        %1432 = vmatprep.subr.mxu0 0.0
        %1433 = vmatpush2.msra.mxu0 0.0
        %1434 = vmatprep.subr.mxu0 0.0
        %1435 = vmatpush2.msra.mxu0 0.0
        %1436 = vmatprep.subr.mxu0 0.0
        %1437 = vmatpush2.msra.mxu0 0.0
        %1438 = vmatprep.subr.mxu0 0.0
        %1439 = vmatpush2.msra.mxu0 0.0
        %1440 = vmatprep.subr.mxu0 0.0
        %1441 = vmatpush2.msra.mxu0 0.0
        %1442 = vmatprep.subr.mxu0 0.0
        %1443 = vmatpush2.msra.mxu0 0.0
        %1444 = vmatprep.mubr.f32.mxu0 0.0
        %1445 = vmatmul.mubr.f32.gmra.mxu0 %v1146
        %v1446 = vpop.f32.mrf.mxu0
        %v1447 = vadd.f32 0.0, %v1446
        %v1448 = vpop.f32.mrf.mxu0
        %1449 = vdwg.mxu0
        %1450 = vmatprep.subr.mxu0 0.0
        %1451 = vmatpush1.msra.mxu0 0.0
        %1452 = vmatprep.subr.mxu0 0.0
        %1453 = vmatpush1.msra.mxu0 0.0
        %1454 = vmatprep.subr.mxu0 0.0
        %1455 = vmatpush1.msra.mxu0 0.0
        %1456 = vmatprep.subr.mxu0 0.0
        %1457 = vmatpush1.msra.mxu0 0.0
        %1458 = vmatprep.subr.mxu0 0.0
        %1459 = vmatpush1.msra.mxu0 0.0
        %1460 = vmatprep.subr.mxu0 0.0
        %1461 = vmatpush1.msra.mxu0 0.0
        %1462 = vmatprep.subr.mxu0 0.0
        %1463 = vmatpush1.msra.mxu0 0.0
        %1464 = vmatprep.subr.mxu0 0.0
        %1465 = vmatpush1.msra.mxu0 0.0
        %1466 = vmatprep.subr.mxu0 0.0
        %1467 = vmatpush1.msra.mxu0 0.0
        %1468 = vmatprep.subr.mxu0 0.0
        %1469 = vmatpush1.msra.mxu0 0.0
        %1470 = vmatprep.subr.mxu0 0.0
        %1471 = vmatpush1.msra.mxu0 0.0
        %1472 = vmatprep.subr.mxu0 0.0
        %1473 = vmatpush1.msra.mxu0 0.0
        %1474 = vmatprep.subr.mxu0 0.0
        %1475 = vmatpush1.msra.mxu0 %v1374
        %1476 = vmatprep.subr.mxu0 0.0
        %1477 = vmatpush1.msra.mxu0 %v1373
        %1478 = vmatprep.subr.mxu0 0.0
        %1479 = vmatpush1.msra.mxu0 %v1372
        %1480 = vmatprep.subr.mxu0 0.0
        %1481 = vmatpush1.msra.mxu0 %v1371
        %1482 = vmatprep.subr.mxu0 0.0
        %1483 = vmatpush2.msra.mxu0 0.0
        %1484 = vmatprep.subr.mxu0 0.0
        %1485 = vmatpush2.msra.mxu0 0.0
        %1486 = vmatprep.subr.mxu0 0.0
        %1487 = vmatpush2.msra.mxu0 0.0
        %1488 = vmatprep.subr.mxu0 0.0
        %1489 = vmatpush2.msra.mxu0 0.0
        %1490 = vmatprep.subr.mxu0 0.0
        %1491 = vmatpush2.msra.mxu0 0.0
        %1492 = vmatprep.subr.mxu0 0.0
        %1493 = vmatpush2.msra.mxu0 0.0
        %1494 = vmatprep.subr.mxu0 0.0
        %1495 = vmatpush2.msra.mxu0 0.0
        %1496 = vmatprep.subr.mxu0 0.0
        %1497 = vmatpush2.msra.mxu0 0.0
        %1498 = vmatprep.subr.mxu0 0.0
        %1499 = vmatpush2.msra.mxu0 0.0
        %1500 = vmatprep.subr.mxu0 0.0
        %1501 = vmatpush2.msra.mxu0 0.0
        %1502 = vmatprep.subr.mxu0 0.0
        %1503 = vmatpush2.msra.mxu0 0.0
        %1504 = vmatprep.subr.mxu0 0.0
        %1505 = vmatpush2.msra.mxu0 0.0
        %1506 = vmatprep.subr.mxu0 0.0
        %1507 = vmatpush2.msra.mxu0 0.0
        %1508 = vmatprep.subr.mxu0 0.0
        %1509 = vmatpush2.msra.mxu0 0.0
        %1510 = vmatprep.subr.mxu0 0.0
        %1511 = vmatpush2.msra.mxu0 0.0
        %1512 = vmatprep.subr.mxu0 0.0
        %1513 = vmatpush2.msra.mxu0 0.0
        %1514 = vmatprep.mubr.f32.mxu0 0.0
        %1515 = vmatmul.mubr.f32.gmra.mxu0 %v1219
        %v1516 = vpop.f32.mrf.mxu0
        %v1517 = vadd.f32 %v1447, %v1516
        %v1518 = vpop.f32.mrf.mxu0
        %1519 = vdwg.mxu0
        %s1520 = scalar_lea.vmem %s7, 64
        %v1521 = vld [vmem:[%s1520] sm:$0xff]
        %v1522 = vld [vmem:[%s1520 + $0x8] sm:$0xff]
        %v1523 = vld [vmem:[%s1520 + $0x10] sm:$0xff]
        %v1524 = vld [vmem:[%s1520 + $0x18] sm:$0xff]
        %1525 = vmatprep.subr.mxu0 0.0
        %1526 = vmatpush1.msra.mxu0 0.0
        %1527 = vmatprep.subr.mxu0 0.0
        %1528 = vmatpush1.msra.mxu0 0.0
        %1529 = vmatprep.subr.mxu0 0.0
        %1530 = vmatpush1.msra.mxu0 0.0
        %1531 = vmatprep.subr.mxu0 0.0
        %1532 = vmatpush1.msra.mxu0 0.0
        %1533 = vmatprep.subr.mxu0 0.0
        %1534 = vmatpush1.msra.mxu0 0.0
        %1535 = vmatprep.subr.mxu0 0.0
        %1536 = vmatpush1.msra.mxu0 0.0
        %1537 = vmatprep.subr.mxu0 0.0
        %1538 = vmatpush1.msra.mxu0 0.0
        %1539 = vmatprep.subr.mxu0 0.0
        %1540 = vmatpush1.msra.mxu0 0.0
        %1541 = vmatprep.subr.mxu0 0.0
        %1542 = vmatpush1.msra.mxu0 0.0
        %1543 = vmatprep.subr.mxu0 0.0
        %1544 = vmatpush1.msra.mxu0 0.0
        %1545 = vmatprep.subr.mxu0 0.0
        %1546 = vmatpush1.msra.mxu0 0.0
        %1547 = vmatprep.subr.mxu0 0.0
        %1548 = vmatpush1.msra.mxu0 0.0
        %1549 = vmatprep.subr.mxu0 0.0
        %1550 = vmatpush1.msra.mxu0 %v1524
        %1551 = vmatprep.subr.mxu0 0.0
        %1552 = vmatpush1.msra.mxu0 %v1523
        %1553 = vmatprep.subr.mxu0 0.0
        %1554 = vmatpush1.msra.mxu0 %v1522
        %1555 = vmatprep.subr.mxu0 0.0
        %1556 = vmatpush1.msra.mxu0 %v1521
        %1557 = vmatprep.subr.mxu0 0.0
        %1558 = vmatpush2.msra.mxu0 0.0
        %1559 = vmatprep.subr.mxu0 0.0
        %1560 = vmatpush2.msra.mxu0 0.0
        %1561 = vmatprep.subr.mxu0 0.0
        %1562 = vmatpush2.msra.mxu0 0.0
        %1563 = vmatprep.subr.mxu0 0.0
        %1564 = vmatpush2.msra.mxu0 0.0
        %1565 = vmatprep.subr.mxu0 0.0
        %1566 = vmatpush2.msra.mxu0 0.0
        %1567 = vmatprep.subr.mxu0 0.0
        %1568 = vmatpush2.msra.mxu0 0.0
        %1569 = vmatprep.subr.mxu0 0.0
        %1570 = vmatpush2.msra.mxu0 0.0
        %1571 = vmatprep.subr.mxu0 0.0
        %1572 = vmatpush2.msra.mxu0 0.0
        %1573 = vmatprep.subr.mxu0 0.0
        %1574 = vmatpush2.msra.mxu0 0.0
        %1575 = vmatprep.subr.mxu0 0.0
        %1576 = vmatpush2.msra.mxu0 0.0
        %1577 = vmatprep.subr.mxu0 0.0
        %1578 = vmatpush2.msra.mxu0 0.0
        %1579 = vmatprep.subr.mxu0 0.0
        %1580 = vmatpush2.msra.mxu0 0.0
        %1581 = vmatprep.subr.mxu0 0.0
        %1582 = vmatpush2.msra.mxu0 0.0
        %1583 = vmatprep.subr.mxu0 0.0
        %1584 = vmatpush2.msra.mxu0 0.0
        %1585 = vmatprep.subr.mxu0 0.0
        %1586 = vmatpush2.msra.mxu0 0.0
        %1587 = vmatprep.subr.mxu0 0.0
        %1588 = vmatpush2.msra.mxu0 0.0
        %1589 = vmatprep.mubr.f32.mxu0 0.0
        %1590 = vmatmul.mubr.f32.gmra.mxu0 %v1298
        %v1591 = vpop.f32.mrf.mxu0
        %v1592 = vadd.f32 0.0, %v1591
        %v1593 = vpop.f32.mrf.mxu0
        %1594 = vdwg.mxu0
        %v1595 = vadd.f32 %v1517, %v1592
        %v1596 = vmax.f32 %v1370, %v1595
        %v1597 = vld [vmem:[%s8] sm:$0x1]
        %v1599 = vlaneseq
        %v1600 = vshrl.u32 %v1599, 7
        %v1601 = vsub.s32 0, %v1600
        %v1602 = vrot.slane %v1597, %v1601
        %v1604 = vadd.f32 %v1596, %v1602
        %v1605 = vmax.f32 %v1604, 0.0
        %v1606 = vld [vmem:[%s9] sm:$0xff]
        %v1607 = vld [vmem:[%s9 + $0x8] sm:$0xff]
        %v1608 = vld [vmem:[%s9 + $0x10] sm:$0xff]
        %v1609 = vld [vmem:[%s9 + $0x18] sm:$0xff]
        %v1610 = vld [vmem:[%s10] sm:$0x1]
        %v1612 = vlaneseq
        %v1613 = vshrl.u32 %v1612, 7
        %v1614 = vsub.s32 0, %v1613
        %v1615 = vrot.slane %v1610, %v1614
        %v1618 = vsel %vm1129, %v1605, 0
        %1620 = vmatprep.subr.mxu0 0.0
        %1621 = vmatpush1.msra.mxu0 0.0
        %1622 = vmatprep.subr.mxu0 0.0
        %1623 = vmatpush1.msra.mxu0 0.0
        %1624 = vmatprep.subr.mxu0 0.0
        %1625 = vmatpush1.msra.mxu0 0.0
        %1626 = vmatprep.subr.mxu0 0.0
        %1627 = vmatpush1.msra.mxu0 0.0
        %1628 = vmatprep.subr.mxu0 0.0
        %1629 = vmatpush1.msra.mxu0 0.0
        %1630 = vmatprep.subr.mxu0 0.0
        %1631 = vmatpush1.msra.mxu0 0.0
        %1632 = vmatprep.subr.mxu0 0.0
        %1633 = vmatpush1.msra.mxu0 0.0
        %1634 = vmatprep.subr.mxu0 0.0
        %1635 = vmatpush1.msra.mxu0 0.0
        %1636 = vmatprep.subr.mxu0 0.0
        %1637 = vmatpush1.msra.mxu0 0.0
        %1638 = vmatprep.subr.mxu0 0.0
        %1639 = vmatpush1.msra.mxu0 0.0
        %1640 = vmatprep.subr.mxu0 0.0
        %1641 = vmatpush1.msra.mxu0 0.0
        %1642 = vmatprep.subr.mxu0 0.0
        %1643 = vmatpush1.msra.mxu0 0.0
        %1644 = vmatprep.subr.mxu0 0.0
        %1645 = vmatpush1.msra.mxu0 %v1609
        %1646 = vmatprep.subr.mxu0 0.0
        %1647 = vmatpush1.msra.mxu0 %v1608
        %1648 = vmatprep.subr.mxu0 0.0
        %1649 = vmatpush1.msra.mxu0 %v1607
        %1650 = vmatprep.subr.mxu0 0.0
        %1651 = vmatpush1.msra.mxu0 %v1606
        %1652 = vmatprep.subr.mxu0 0.0
        %1653 = vmatpush2.msra.mxu0 0.0
        %1654 = vmatprep.subr.mxu0 0.0
        %1655 = vmatpush2.msra.mxu0 0.0
        %1656 = vmatprep.subr.mxu0 0.0
        %1657 = vmatpush2.msra.mxu0 0.0
        %1658 = vmatprep.subr.mxu0 0.0
        %1659 = vmatpush2.msra.mxu0 0.0
        %1660 = vmatprep.subr.mxu0 0.0
        %1661 = vmatpush2.msra.mxu0 0.0
        %1662 = vmatprep.subr.mxu0 0.0
        %1663 = vmatpush2.msra.mxu0 0.0
        %1664 = vmatprep.subr.mxu0 0.0
        %1665 = vmatpush2.msra.mxu0 0.0
        %1666 = vmatprep.subr.mxu0 0.0
        %1667 = vmatpush2.msra.mxu0 0.0
        %1668 = vmatprep.subr.mxu0 0.0
        %1669 = vmatpush2.msra.mxu0 0.0
        %1670 = vmatprep.subr.mxu0 0.0
        %1671 = vmatpush2.msra.mxu0 0.0
        %1672 = vmatprep.subr.mxu0 0.0
        %1673 = vmatpush2.msra.mxu0 0.0
        %1674 = vmatprep.subr.mxu0 0.0
        %1675 = vmatpush2.msra.mxu0 0.0
        %1676 = vmatprep.subr.mxu0 0.0
        %1677 = vmatpush2.msra.mxu0 0.0
        %1678 = vmatprep.subr.mxu0 0.0
        %1679 = vmatpush2.msra.mxu0 0.0
        %1680 = vmatprep.subr.mxu0 0.0
        %1681 = vmatpush2.msra.mxu0 0.0
        %1682 = vmatprep.subr.mxu0 0.0
        %1683 = vmatpush2.msra.mxu0 0.0
        %1684 = vmatprep.mubr.f32.mxu0 0.0
        %1685 = vmatmul.mubr.f32.gmra.mxu0 %v1618
        %v1686 = vpop.f32.mrf.mxu0
        %v1687 = vadd.f32 %v1615, %v1686
        %v1688 = vpop.f32.mrf.mxu0
        %1689 = vdwg.mxu0
        %1690 = vst.msk [vmem:[%s377] sm:$0xff] %vm1129, %v1687
        %s1691 = sand.u32 %s269, 1
        %s1692 = scalar_lea.sflag [#allocation6], %s1691
        %s1693 = sand.u32 %s269, 1
        %s1694 = smul.addr %s1693, 8
        %s1695 = scalar_lea.vmem [#allocation5], %s1694
        // Predicated region
        $region65: #{conv_stack_forward.1} parent=63 // pred_check
          %p1696 = pneg %p279
        $region66: #{conv_stack_forward.1} parent=63 // pred_check_branch
          %1698 = sbr.rel (%p1696) target = $region68
        $region67: #{conv_stack_forward.1} parent=63 // pred_region
          %s1700 = ssub.s32 128, 128
          %1701 = vsyncadd %s1692, %s1700
          %s1702 = smul.addr %s25, 128
          %s1703 = scalar_lea.hbm %s11, %s1702
          %s1705 = sshll.u32 %s1695, 4
          %s1706 = int_to_ptr.vmem [resolvable:$true] %s1705
          %1708 = dma.vmem_to_hbm [thread:$0]  %s1706, 128, %s1703, %s1692
        $region68: #{conv_stack_forward.1} parent=63 // pred_fallthru
          _
      $region64: #{conv_stack_forward.1} parent=5 // pred_fallthru
        _
      %p1709 = scmp.le.s32.totalorder 2, %s20
      // Predicated region
      $region69: #{conv_stack_forward.1} parent=5 // pred_check
        %p1710 = pneg %p1709
      $region70: #{conv_stack_forward.1} parent=5 // pred_check_branch
        %1712 = sbr.rel (%p1710) target = $region72
      $region71: #{conv_stack_forward.1} parent=5 // pred_region
        %s1713 = ssub.s32 %s20, 2
        // Predicated region
        $region73: #{conv_stack_forward.1} parent=71 // pred_check
          %p1714 = pneg %p285
        $region74: #{conv_stack_forward.1} parent=71 // pred_check_branch
          %1716 = sbr.rel (%p1714) target = $region76
        $region75: #{conv_stack_forward.1} parent=71 // pred_region
          %s1717 = sand.u32 %s270, 1
          %s1718 = scalar_lea.sflag [#allocation6], %s1717
          %s1719 = sand.u32 %s270, 1
          %s1720 = smul.addr %s1719, 8
          %s1721 = scalar_lea.vmem [#allocation5], %s1720
          %1722 = dma.done %s1718, 128
        $region76: #{conv_stack_forward.1} parent=71 // pred_fallthru
          _
      $region72: #{conv_stack_forward.1} parent=5 // pred_fallthru
        _
    $region6: #{conv_stack_forward.1} parent=1 // loop_footer
      %s24 = sadd.s32 1, %s20
    $region7: #{conv_stack_forward.1} parent=1 // loop_footer_branch
      %19 = sbr.rel target = $region3
    $region8: #{conv_stack_forward.1} parent=1 // loop_exit
      _
    %1723 = vsyncpa [#allocation6], 1
    %s1724 = scalar_lea.sflag [#allocation6], 1
    %1725 = vsyncpa %s1724, 1

</llo_original>
